<compile_context>
chip_gen: v7x
topology: tpu7x:2x2x1
jax: 0.10.0
libtpu: 0.0.40
codegen_flags: <defaults>
</compile_context>

<pallas_src>
import functools

import jax
import jax.numpy as jnp
from jax.experimental import pallas as pl
from jax.experimental.pallas import tpu as pltpu

HIDDEN_SIZES = [128, 64, 64]   # second assignment in GammaNN.__init__ wins
_LANE = 128
_SUBLANE = 16                  # bf16 sublane packing


def _round_up(x, m):
    return ((x + m - 1) // m) * m


# ---------------------------------------------------------------------------
# Fused kernel: `num_nets` independent 4-layer MLPs sharing the same input x.
# Each net's padded head (w4/b4) targets its own disjoint output columns, so
# summing the per-net head outputs yields the concatenated prediction.
# ---------------------------------------------------------------------------
def _fused_mlp_kernel(num_nets, x_ref, *rest):
    o_ref = rest[-1]
    prefs = rest[:-1]
    x = x_ref[...]                                    # (TB, D_in) bf16
    out = jnp.zeros(o_ref.shape, jnp.float32)
    for n in range(num_nets):
        w1, b1, w2, b2, w3, b3, w4, b4 = (r[...] for r in prefs[8 * n: 8 * n + 8])
        h = jnp.dot(x, w1, preferred_element_type=jnp.float32) + b1
        h = jnp.maximum(h, 0.0).astype(jnp.bfloat16)          # RELU(fc1); drop1 = id (eval)
        h = jnp.dot(h, w2, preferred_element_type=jnp.float32) + b2
        h = jnp.maximum(h, 0.0).astype(jnp.bfloat16)          # RELU(fc2); drop2 = id (eval)
        h = jnp.dot(h, w3, preferred_element_type=jnp.float32) + b3
        h = jnp.maximum(h, 0.0).astype(jnp.bfloat16)          # RELU(fc3)
        out = out + jnp.dot(h, w4, preferred_element_type=jnp.float32) + b4
    o_ref[...] = out


# ---------------------------------------------------------------------------
# Parameter padding to lane-dense (128-multiple) blocks.
# ---------------------------------------------------------------------------
def _pad_block(a, shape, dtype, row_off=0, col_off=0):
    out = jnp.zeros(shape, dtype)
    return out.at[row_off:row_off + a.shape[0],
                  col_off:col_off + a.shape[1]].set(a.astype(dtype))


def _pad_net_params(p, net_idx, d_in, d_out, out_pad):
    w1, b1, w2, b2, w3, b3, w4, b4 = p
    hp = [_round_up(h, _LANE) for h in HIDDEN_SIZES]
    co = net_idx * d_out                      # this net's output-column offset
    return [
        _pad_block(w1, (d_in, hp[0]), jnp.bfloat16),
        _pad_block(b1, (1, hp[0]), jnp.float32),
        _pad_block(w2, (hp[0], hp[1]), jnp.bfloat16),
        _pad_block(b2, (1, hp[1]), jnp.float32),
        _pad_block(w3, (hp[1], hp[2]), jnp.bfloat16),
        _pad_block(b3, (1, hp[2]), jnp.float32),
        _pad_block(w4, (hp[2], out_pad), jnp.bfloat16, col_off=co),
        _pad_block(b4, (1, out_pad), jnp.float32, col_off=co),
    ]


# ---------------------------------------------------------------------------
# Fused forward wrapper.
# ---------------------------------------------------------------------------
@functools.partial(jax.jit, static_argnames=("d_out", "block_batch"))
def fused_mlp_forward(x, nets_params, d_out, block_batch=None):
    """Run len(nets_params) DeepNets on x inside one Pallas kernel.

    x: (B, D_in) f32.  nets_params: tuple of per-net (w1,b1,...,w4,b4) tuples
    with weights stored as (in, out) — equivalent to torch's x @ W.T + b.
    Returns (B, len(nets_params) * d_out) f32; net i occupies columns
    [i*d_out, (i+1)*d_out).
    """
    B, d_in = x.shape
    num_nets = len(nets_params)
    total_out = num_nets * d_out
    out_pad = _round_up(total_out, _LANE)

    if block_batch is None:
        block_batch = min(256, _round_up(B, _SUBLANE))   # 256-row tiles fill the MXU M axis
    tb = _round_up(block_batch, _SUBLANE)
    b_pad = _round_up(B, tb)

    x_p = jnp.pad(x, ((0, b_pad - B), (0, 0))).astype(jnp.bfloat16)
    params = []
    for n, p in enumerate(nets_params):
        params.extend(_pad_net_params(p, n, d_in, d_out, out_pad))

    hp = [_round_up(h, _LANE) for h in HIDDEN_SIZES]
    flops = 2 * b_pad * num_nets * (d_in * hp[0] + hp[0] * hp[1]
                                    + hp[1] * hp[2] + hp[2] * out_pad)
    bytes_accessed = (x_p.size * 2 + b_pad * out_pad * 4
                      + sum(int(p.size) * p.dtype.itemsize for p in params))

    grid = (b_pad // tb,)
    kernel = functools.partial(_fused_mlp_kernel, num_nets)
    weight_specs = [pl.BlockSpec(p.shape, lambda i: (0, 0)) for p in params]

    out = pl.pallas_call(
        kernel,
        out_shape=jax.ShapeDtypeStruct((b_pad, out_pad), jnp.float32),
        grid=grid,
        in_specs=[pl.BlockSpec((tb, d_in), lambda i: (i, 0))] + weight_specs,
        out_specs=pl.BlockSpec((tb, out_pad), lambda i: (i, 0)),
        compiler_params=pltpu.CompilerParams(
            dimension_semantics=("parallel",)),
        cost_estimate=pl.CostEstimate(
            flops=flops, transcendentals=0, bytes_accessed=bytes_accessed),
    )(x_p, *params)
    return out[:B, :total_out]


# ---------------------------------------------------------------------------
# GammaNN forward (both model_dist variants)
# ---------------------------------------------------------------------------
def gamma_nn_forward(src, model_dist, params, block_batch=None):
    if model_dist == "cat":
        deepnet_params, num_cat_bins = params
        return fused_mlp_forward(src, (deepnet_params,), num_cat_bins,
                                 block_batch=block_batch)
    elif model_dist == "lognormal":
        mu_params, sigma_params = params
        # columns: [mu, pre_log_sigma]  == torch.cat([mu, pre_log_sigma], dim=1)
        return fused_mlp_forward(src, (mu_params, sigma_params), 1,
                                 block_batch=block_batch)
    raise ValueError(model_dist)


# ---------------------------------------------------------------------------
# Deterministic parameter init (mimics torch.nn.Linear default U(-1/sqrt(fan_in), .))
# ---------------------------------------------------------------------------
def _init_linear(key, fan_in, fan_out):
    kw, kb = jax.random.split(key)
    bound = 1.0 / (fan_in ** 0.5)
    w = jax.random.uniform(kw, (fan_in, fan_out), jnp.float32, -bound, bound)
    b = jax.random.uniform(kb, (1, fan_out), jnp.float32, -bound, bound)
    return w, b


def init_deepnet_params(key, d_in, d_out, hidden_sizes=HIDDEN_SIZES):
    keys = jax.random.split(key, 4)
    dims = [d_in] + list(hidden_sizes) + [d_out]
    params = []
    for i in range(4):
        w, b = _init_linear(keys[i], dims[i], dims[i + 1])
        params.extend([w, b])
    return tuple(params)


if __name__ == "__main__":
    key = jax.random.PRNGKey(0)
    k_x, k_mu, k_sigma, k_cat = jax.random.split(key, 4)

    B, D_in = 24, 16
    src = jax.random.normal(k_x, (B, D_in), dtype=jnp.float32)

    # Pure-JAX reference with the same bf16-in / f32-accumulate numerics.
    def ref_deepnet(x, p):
        w1, b1, w2, b2, w3, b3, w4, b4 = p
        bf = jnp.bfloat16
        h = jnp.maximum(jnp.dot(x.astype(bf), w1.astype(bf),
                                preferred_element_type=jnp.float32) + b1, 0.0)
        h = jnp.maximum(jnp.dot(h.astype(bf), w2.astype(bf),
                                preferred_element_type=jnp.float32) + b2, 0.0)
        h = jnp.maximum(jnp.dot(h.astype(bf), w3.astype(bf),
                                preferred_element_type=jnp.float32) + b3, 0.0)
        return jnp.dot(h.astype(bf), w4.astype(bf),
                       preferred_element_type=jnp.float32) + b4

    # --- lognormal variant: GammaNN(..., model_dist='lognormal') ------------
    mu_params = init_deepnet_params(k_mu, D_in, 1)
    sigma_params = init_deepnet_params(k_sigma, D_in, 1)
    pred_ln = gamma_nn_forward(src, "lognormal", (mu_params, sigma_params),
                               block_batch=16)      # B=24, TB=16 -> grid of 2
    pred_ln = jax.block_until_ready(pred_ln)
    assert pred_ln.shape == (B, 2), pred_ln.shape

    ref_ln = jnp.concatenate(
        [ref_deepnet(src, mu_params).reshape(-1, 1),
         ref_deepnet(src, sigma_params).reshape(-1, 1)], axis=1)
    assert jnp.allclose(pred_ln, ref_ln, atol=2e-3, rtol=2e-3), (
        float(jnp.max(jnp.abs(pred_ln - ref_ln))))

    # --- cat variant: GammaNN(..., model_dist='cat', num_cat_bins=10) -------
    num_cat_bins = 10
    cat_params = init_deepnet_params(k_cat, D_in, num_cat_bins)
    pred_cat = gamma_nn_forward(src, "cat", (cat_params, num_cat_bins),
                                block_batch=16)
    pred_cat = jax.block_until_ready(pred_cat)
    assert pred_cat.shape == (B, num_cat_bins), pred_cat.shape

    ref_cat = ref_deepnet(src, cat_params)
    assert jnp.allclose(pred_cat, ref_cat, atol=2e-3, rtol=2e-3), (
        float(jnp.max(jnp.abs(pred_cat - ref_cat))))

    print("KERNEL_OK")
</pallas_src>

<mosaic_0001>
module attributes {stable_mosaic.version = 11 : i64} {
  func.func @_fused_mlp_kernel(%arg0: i32, %arg1: memref<16x16xbf16, #tpu.memory_space<vmem>>, %arg2: memref<16x128xbf16, #tpu.memory_space<vmem>>, %arg3: memref<1x128xf32, #tpu.memory_space<vmem>>, %arg4: memref<128x128xbf16, #tpu.memory_space<vmem>>, %arg5: memref<1x128xf32, #tpu.memory_space<vmem>>, %arg6: memref<128x128xbf16, #tpu.memory_space<vmem>>, %arg7: memref<1x128xf32, #tpu.memory_space<vmem>>, %arg8: memref<128x128xbf16, #tpu.memory_space<vmem>>, %arg9: memref<1x128xf32, #tpu.memory_space<vmem>>, %arg10: memref<16x128xbf16, #tpu.memory_space<vmem>>, %arg11: memref<1x128xf32, #tpu.memory_space<vmem>>, %arg12: memref<128x128xbf16, #tpu.memory_space<vmem>>, %arg13: memref<1x128xf32, #tpu.memory_space<vmem>>, %arg14: memref<128x128xbf16, #tpu.memory_space<vmem>>, %arg15: memref<1x128xf32, #tpu.memory_space<vmem>>, %arg16: memref<128x128xbf16, #tpu.memory_space<vmem>>, %arg17: memref<1x128xf32, #tpu.memory_space<vmem>>, %arg18: memref<16x128xf32, #tpu.memory_space<vmem>>) attributes {dimension_semantics = [#tpu.dimension_semantics<parallel>], iteration_bounds = array<i64: 2>, scalar_prefetch = 0 : i64, scratch_operands = 0 : i64, tpu.core_type = #tpu.core_type<tc>, window_params = [{transform_indices = @transform_0, window_bounds = array<i64: 16, 16>}, {pipeline_mode = #tpu.pipeline_mode<synchronous>, transform_indices = @transform_1, window_bounds = array<i64: 16, 128>}, {pipeline_mode = #tpu.pipeline_mode<synchronous>, transform_indices = @transform_2, window_bounds = array<i64: 1, 128>}, {pipeline_mode = #tpu.pipeline_mode<synchronous>, transform_indices = @transform_3, window_bounds = array<i64: 128, 128>}, {pipeline_mode = #tpu.pipeline_mode<synchronous>, transform_indices = @transform_4, window_bounds = array<i64: 1, 128>}, {pipeline_mode = #tpu.pipeline_mode<synchronous>, transform_indices = @transform_5, window_bounds = array<i64: 128, 128>}, {pipeline_mode = #tpu.pipeline_mode<synchronous>, transform_indices = @transform_6, window_bounds = array<i64: 1, 128>}, {pipeline_mode = #tpu.pipeline_mode<synchronous>, transform_indices = @transform_7, window_bounds = array<i64: 128, 128>}, {pipeline_mode = #tpu.pipeline_mode<synchronous>, transform_indices = @transform_8, window_bounds = array<i64: 1, 128>}, {pipeline_mode = #tpu.pipeline_mode<synchronous>, transform_indices = @transform_9, window_bounds = array<i64: 16, 128>}, {pipeline_mode = #tpu.pipeline_mode<synchronous>, transform_indices = @transform_10, window_bounds = array<i64: 1, 128>}, {pipeline_mode = #tpu.pipeline_mode<synchronous>, transform_indices = @transform_11, window_bounds = array<i64: 128, 128>}, {pipeline_mode = #tpu.pipeline_mode<synchronous>, transform_indices = @transform_12, window_bounds = array<i64: 1, 128>}, {pipeline_mode = #tpu.pipeline_mode<synchronous>, transform_indices = @transform_13, window_bounds = array<i64: 128, 128>}, {pipeline_mode = #tpu.pipeline_mode<synchronous>, transform_indices = @transform_14, window_bounds = array<i64: 1, 128>}, {pipeline_mode = #tpu.pipeline_mode<synchronous>, transform_indices = @transform_15, window_bounds = array<i64: 128, 128>}, {pipeline_mode = #tpu.pipeline_mode<synchronous>, transform_indices = @transform_16, window_bounds = array<i64: 1, 128>}, {transform_indices = @transform_17, window_bounds = array<i64: 16, 128>}]} {
    %c0 = arith.constant 0 : index
    %c0_0 = arith.constant 0 : index
    %0 = vector.load %arg1[%c0, %c0_0] : memref<16x16xbf16, #tpu.memory_space<vmem>>, vector<16x16xbf16>
    %cst = arith.constant 0.000000e+00 : f32
    %1 = vector.broadcast %cst : f32 to vector<16x128xf32>
    %c0_1 = arith.constant 0 : index
    %c0_2 = arith.constant 0 : index
    %2 = vector.load %arg2[%c0_1, %c0_2] : memref<16x128xbf16, #tpu.memory_space<vmem>>, vector<16x128xbf16>
    %c0_3 = arith.constant 0 : index
    %c0_4 = arith.constant 0 : index
    %3 = vector.load %arg3[%c0_3, %c0_4] : memref<1x128xf32, #tpu.memory_space<vmem>>, vector<1x128xf32>
    %c0_5 = arith.constant 0 : index
    %c0_6 = arith.constant 0 : index
    %4 = vector.load %arg4[%c0_5, %c0_6] : memref<128x128xbf16, #tpu.memory_space<vmem>>, vector<128x128xbf16>
    %c0_7 = arith.constant 0 : index
    %c0_8 = arith.constant 0 : index
    %5 = vector.load %arg5[%c0_7, %c0_8] : memref<1x128xf32, #tpu.memory_space<vmem>>, vector<1x128xf32>
    %c0_9 = arith.constant 0 : index
    %c0_10 = arith.constant 0 : index
    %6 = vector.load %arg6[%c0_9, %c0_10] : memref<128x128xbf16, #tpu.memory_space<vmem>>, vector<128x128xbf16>
    %c0_11 = arith.constant 0 : index
    %c0_12 = arith.constant 0 : index
    %7 = vector.load %arg7[%c0_11, %c0_12] : memref<1x128xf32, #tpu.memory_space<vmem>>, vector<1x128xf32>
    %c0_13 = arith.constant 0 : index
    %c0_14 = arith.constant 0 : index
    %8 = vector.load %arg8[%c0_13, %c0_14] : memref<128x128xbf16, #tpu.memory_space<vmem>>, vector<128x128xbf16>
    %c0_15 = arith.constant 0 : index
    %c0_16 = arith.constant 0 : index
    %9 = vector.load %arg9[%c0_15, %c0_16] : memref<1x128xf32, #tpu.memory_space<vmem>>, vector<1x128xf32>
    %cst_17 = arith.constant dense<0.000000e+00> : vector<16x128xf32>
    %10 = tpu.matmul %0, %2, %cst_17 {dimension_numbers = #tpu.dot_dimension_numbers<[1], [0], [0], [1], [0, 0, 1, 1], [], []>} : vector<16x16xbf16>, vector<16x128xbf16>, vector<16x128xf32> -> vector<16x128xf32>
    %11 = vector.broadcast %3 : vector<1x128xf32> to vector<16x128xf32>
    %12 = arith.addf %10, %11 : vector<16x128xf32>
    %cst_18 = arith.constant 0.000000e+00 : f32
    %13 = vector.broadcast %cst_18 : f32 to vector<16x128xf32>
    %14 = arith.maximumf %12, %13 : vector<16x128xf32>
    %15 = arith.truncf %14 : vector<16x128xf32> to vector<16x128xbf16>
    %cst_19 = arith.constant dense<0.000000e+00> : vector<16x128xf32>
    %16 = tpu.matmul %15, %4, %cst_19 {dimension_numbers = #tpu.dot_dimension_numbers<[1], [0], [0], [1], [0, 0, 1, 1], [], []>} : vector<16x128xbf16>, vector<128x128xbf16>, vector<16x128xf32> -> vector<16x128xf32>
    %17 = vector.broadcast %5 : vector<1x128xf32> to vector<16x128xf32>
    %18 = arith.addf %16, %17 : vector<16x128xf32>
    %cst_20 = arith.constant 0.000000e+00 : f32
    %19 = vector.broadcast %cst_20 : f32 to vector<16x128xf32>
    %20 = arith.maximumf %18, %19 : vector<16x128xf32>
    %21 = arith.truncf %20 : vector<16x128xf32> to vector<16x128xbf16>
    %cst_21 = arith.constant dense<0.000000e+00> : vector<16x128xf32>
    %22 = tpu.matmul %21, %6, %cst_21 {dimension_numbers = #tpu.dot_dimension_numbers<[1], [0], [0], [1], [0, 0, 1, 1], [], []>} : vector<16x128xbf16>, vector<128x128xbf16>, vector<16x128xf32> -> vector<16x128xf32>
    %23 = vector.broadcast %7 : vector<1x128xf32> to vector<16x128xf32>
    %24 = arith.addf %22, %23 : vector<16x128xf32>
    %cst_22 = arith.constant 0.000000e+00 : f32
    %25 = vector.broadcast %cst_22 : f32 to vector<16x128xf32>
    %26 = arith.maximumf %24, %25 : vector<16x128xf32>
    %27 = arith.truncf %26 : vector<16x128xf32> to vector<16x128xbf16>
    %cst_23 = arith.constant dense<0.000000e+00> : vector<16x128xf32>
    %28 = tpu.matmul %27, %8, %cst_23 {dimension_numbers = #tpu.dot_dimension_numbers<[1], [0], [0], [1], [0, 0, 1, 1], [], []>} : vector<16x128xbf16>, vector<128x128xbf16>, vector<16x128xf32> -> vector<16x128xf32>
    %29 = arith.addf %1, %28 : vector<16x128xf32>
    %30 = vector.broadcast %9 : vector<1x128xf32> to vector<16x128xf32>
    %31 = arith.addf %29, %30 : vector<16x128xf32>
    %c0_24 = arith.constant 0 : index
    %c0_25 = arith.constant 0 : index
    %32 = vector.load %arg10[%c0_24, %c0_25] : memref<16x128xbf16, #tpu.memory_space<vmem>>, vector<16x128xbf16>
    %c0_26 = arith.constant 0 : index
    %c0_27 = arith.constant 0 : index
    %33 = vector.load %arg11[%c0_26, %c0_27] : memref<1x128xf32, #tpu.memory_space<vmem>>, vector<1x128xf32>
    %c0_28 = arith.constant 0 : index
    %c0_29 = arith.constant 0 : index
    %34 = vector.load %arg12[%c0_28, %c0_29] : memref<128x128xbf16, #tpu.memory_space<vmem>>, vector<128x128xbf16>
    %c0_30 = arith.constant 0 : index
    %c0_31 = arith.constant 0 : index
    %35 = vector.load %arg13[%c0_30, %c0_31] : memref<1x128xf32, #tpu.memory_space<vmem>>, vector<1x128xf32>
    %c0_32 = arith.constant 0 : index
    %c0_33 = arith.constant 0 : index
    %36 = vector.load %arg14[%c0_32, %c0_33] : memref<128x128xbf16, #tpu.memory_space<vmem>>, vector<128x128xbf16>
    %c0_34 = arith.constant 0 : index
    %c0_35 = arith.constant 0 : index
    %37 = vector.load %arg15[%c0_34, %c0_35] : memref<1x128xf32, #tpu.memory_space<vmem>>, vector<1x128xf32>
    %c0_36 = arith.constant 0 : index
    %c0_37 = arith.constant 0 : index
    %38 = vector.load %arg16[%c0_36, %c0_37] : memref<128x128xbf16, #tpu.memory_space<vmem>>, vector<128x128xbf16>
    %c0_38 = arith.constant 0 : index
    %c0_39 = arith.constant 0 : index
    %39 = vector.load %arg17[%c0_38, %c0_39] : memref<1x128xf32, #tpu.memory_space<vmem>>, vector<1x128xf32>
    %cst_40 = arith.constant dense<0.000000e+00> : vector<16x128xf32>
    %40 = tpu.matmul %0, %32, %cst_40 {dimension_numbers = #tpu.dot_dimension_numbers<[1], [0], [0], [1], [0, 0, 1, 1], [], []>} : vector<16x16xbf16>, vector<16x128xbf16>, vector<16x128xf32> -> vector<16x128xf32>
    %41 = vector.broadcast %33 : vector<1x128xf32> to vector<16x128xf32>
    %42 = arith.addf %40, %41 : vector<16x128xf32>
    %cst_41 = arith.constant 0.000000e+00 : f32
    %43 = vector.broadcast %cst_41 : f32 to vector<16x128xf32>
    %44 = arith.maximumf %42, %43 : vector<16x128xf32>
    %45 = arith.truncf %44 : vector<16x128xf32> to vector<16x128xbf16>
    %cst_42 = arith.constant dense<0.000000e+00> : vector<16x128xf32>
    %46 = tpu.matmul %45, %34, %cst_42 {dimension_numbers = #tpu.dot_dimension_numbers<[1], [0], [0], [1], [0, 0, 1, 1], [], []>} : vector<16x128xbf16>, vector<128x128xbf16>, vector<16x128xf32> -> vector<16x128xf32>
    %47 = vector.broadcast %35 : vector<1x128xf32> to vector<16x128xf32>
    %48 = arith.addf %46, %47 : vector<16x128xf32>
    %cst_43 = arith.constant 0.000000e+00 : f32
    %49 = vector.broadcast %cst_43 : f32 to vector<16x128xf32>
    %50 = arith.maximumf %48, %49 : vector<16x128xf32>
    %51 = arith.truncf %50 : vector<16x128xf32> to vector<16x128xbf16>
    %cst_44 = arith.constant dense<0.000000e+00> : vector<16x128xf32>
    %52 = tpu.matmul %51, %36, %cst_44 {dimension_numbers = #tpu.dot_dimension_numbers<[1], [0], [0], [1], [0, 0, 1, 1], [], []>} : vector<16x128xbf16>, vector<128x128xbf16>, vector<16x128xf32> -> vector<16x128xf32>
    %53 = vector.broadcast %37 : vector<1x128xf32> to vector<16x128xf32>
    %54 = arith.addf %52, %53 : vector<16x128xf32>
    %cst_45 = arith.constant 0.000000e+00 : f32
    %55 = vector.broadcast %cst_45 : f32 to vector<16x128xf32>
    %56 = arith.maximumf %54, %55 : vector<16x128xf32>
    %57 = arith.truncf %56 : vector<16x128xf32> to vector<16x128xbf16>
    %cst_46 = arith.constant dense<0.000000e+00> : vector<16x128xf32>
    %58 = tpu.matmul %57, %38, %cst_46 {dimension_numbers = #tpu.dot_dimension_numbers<[1], [0], [0], [1], [0, 0, 1, 1], [], []>} : vector<16x128xbf16>, vector<128x128xbf16>, vector<16x128xf32> -> vector<16x128xf32>
    %59 = arith.addf %31, %58 : vector<16x128xf32>
    %60 = vector.broadcast %39 : vector<1x128xf32> to vector<16x128xf32>
    %61 = arith.addf %59, %60 : vector<16x128xf32>
    %c0_47 = arith.constant 0 : index
    %c0_48 = arith.constant 0 : index
    %62 = vector.load %arg18[%c0_47, %c0_48] : memref<16x128xf32, #tpu.memory_space<vmem>>, vector<16x128xf32>
    tpu.vector_store %arg18[%c0_47, %c0_48], %61 {strides = array<i32>} : memref<16x128xf32, #tpu.memory_space<vmem>>, vector<16x128xf32>,
    return
  }
  func.func @transform_0(%arg0: i32) -> (i32, i32) {
    %c0_i32 = arith.constant 0 : i32
    %c0_i32_0 = arith.constant 0 : i32
    return %arg0, %c0_i32 : i32, i32
  }
  func.func @transform_1(%arg0: i32) -> (i32, i32) {
    %c0_i32 = arith.constant 0 : i32
    %c0_i32_0 = arith.constant 0 : i32
    %c0_i32_1 = arith.constant 0 : i32
    return %c0_i32, %c0_i32_0 : i32, i32
  }
  func.func @transform_2(%arg0: i32) -> (i32, i32) {
    %c0_i32 = arith.constant 0 : i32
    %c0_i32_0 = arith.constant 0 : i32
    %c0_i32_1 = arith.constant 0 : i32
    return %c0_i32, %c0_i32_0 : i32, i32
  }
  func.func @transform_3(%arg0: i32) -> (i32, i32) {
    %c0_i32 = arith.constant 0 : i32
    %c0_i32_0 = arith.constant 0 : i32
    %c0_i32_1 = arith.constant 0 : i32
    return %c0_i32, %c0_i32_0 : i32, i32
  }
  func.func @transform_4(%arg0: i32) -> (i32, i32) {
    %c0_i32 = arith.constant 0 : i32
    %c0_i32_0 = arith.constant 0 : i32
    %c0_i32_1 = arith.constant 0 : i32
    return %c0_i32, %c0_i32_0 : i32, i32
  }
  func.func @transform_5(%arg0: i32) -> (i32, i32) {
    %c0_i32 = arith.constant 0 : i32
    %c0_i32_0 = arith.constant 0 : i32
    %c0_i32_1 = arith.constant 0 : i32
    return %c0_i32, %c0_i32_0 : i32, i32
  }
  func.func @transform_6(%arg0: i32) -> (i32, i32) {
    %c0_i32 = arith.constant 0 : i32
    %c0_i32_0 = arith.constant 0 : i32
    %c0_i32_1 = arith.constant 0 : i32
    return %c0_i32, %c0_i32_0 : i32, i32
  }
  func.func @transform_7(%arg0: i32) -> (i32, i32) {
    %c0_i32 = arith.constant 0 : i32
    %c0_i32_0 = arith.constant 0 : i32
    %c0_i32_1 = arith.constant 0 : i32
    return %c0_i32, %c0_i32_0 : i32, i32
  }
  func.func @transform_8(%arg0: i32) -> (i32, i32) {
    %c0_i32 = arith.constant 0 : i32
    %c0_i32_0 = arith.constant 0 : i32
    %c0_i32_1 = arith.constant 0 : i32
    return %c0_i32, %c0_i32_0 : i32, i32
  }
  func.func @transform_9(%arg0: i32) -> (i32, i32) {
    %c0_i32 = arith.constant 0 : i32
    %c0_i32_0 = arith.constant 0 : i32
    %c0_i32_1 = arith.constant 0 : i32
    return %c0_i32, %c0_i32_0 : i32, i32
  }
  func.func @transform_10(%arg0: i32) -> (i32, i32) {
    %c0_i32 = arith.constant 0 : i32
    %c0_i32_0 = arith.constant 0 : i32
    %c0_i32_1 = arith.constant 0 : i32
    return %c0_i32, %c0_i32_0 : i32, i32
  }
  func.func @transform_11(%arg0: i32) -> (i32, i32) {
    %c0_i32 = arith.constant 0 : i32
    %c0_i32_0 = arith.constant 0 : i32
    %c0_i32_1 = arith.constant 0 : i32
    return %c0_i32, %c0_i32_0 : i32, i32
  }
  func.func @transform_12(%arg0: i32) -> (i32, i32) {
    %c0_i32 = arith.constant 0 : i32
    %c0_i32_0 = arith.constant 0 : i32
    %c0_i32_1 = arith.constant 0 : i32
    return %c0_i32, %c0_i32_0 : i32, i32
  }
  func.func @transform_13(%arg0: i32) -> (i32, i32) {
    %c0_i32 = arith.constant 0 : i32
    %c0_i32_0 = arith.constant 0 : i32
    %c0_i32_1 = arith.constant 0 : i32
    return %c0_i32, %c0_i32_0 : i32, i32
  }
  func.func @transform_14(%arg0: i32) -> (i32, i32) {
    %c0_i32 = arith.constant 0 : i32
    %c0_i32_0 = arith.constant 0 : i32
    %c0_i32_1 = arith.constant 0 : i32
    return %c0_i32, %c0_i32_0 : i32, i32
  }
  func.func @transform_15(%arg0: i32) -> (i32, i32) {
    %c0_i32 = arith.constant 0 : i32
    %c0_i32_0 = arith.constant 0 : i32
    %c0_i32_1 = arith.constant 0 : i32
    return %c0_i32, %c0_i32_0 : i32, i32
  }
  func.func @transform_16(%arg0: i32) -> (i32, i32) {
    %c0_i32 = arith.constant 0 : i32
    %c0_i32_0 = arith.constant 0 : i32
    %c0_i32_1 = arith.constant 0 : i32
    return %c0_i32, %c0_i32_0 : i32, i32
  }
  func.func @transform_17(%arg0: i32) -> (i32, i32) {
    %c0_i32 = arith.constant 0 : i32
    %c0_i32_0 = arith.constant 0 : i32
    return %arg0, %c0_i32 : i32, i32
  }
}

</mosaic_0001>

<llo_original>
// kernel: fused_mlp_forward.1
$region0: #{fused_mlp_forward.1}
  #allocation0 [shape = 'u32[]', space=smem, size = 0x4, offset = 0x4, fixed_abs, tag = 'smem constant byte address 0x4 - core index']
  #allocation1 [shape = 'u32[144,128]{1,0:T(1,128)}', space=vmem, size = 0x12000, scoped, tag = 'internal scratch']
  %s0 = inlined_call_operand.vmem [shape: bf16[32,16], index: 0, kind: input, shape index: {}]
  %s1 = inlined_call_operand.vmem [shape: bf16[16,128], index: 1, kind: input, shape index: {}]
  %s2 = inlined_call_operand.vmem [shape: f32[1,128], index: 2, kind: input, shape index: {}]
  %s3 = inlined_call_operand.vmem [shape: bf16[128,128], index: 3, kind: input, shape index: {}]
  %s4 = inlined_call_operand.vmem [shape: f32[1,128], index: 4, kind: input, shape index: {}]
  %s5 = inlined_call_operand.vmem [shape: bf16[128,128], index: 5, kind: input, shape index: {}]
  %s6 = inlined_call_operand.vmem [shape: f32[1,128], index: 6, kind: input, shape index: {}]
  %s7 = inlined_call_operand.vmem [shape: bf16[128,128], index: 7, kind: input, shape index: {}]
  %s8 = inlined_call_operand.vmem [shape: f32[1,128], index: 8, kind: input, shape index: {}]
  %s9 = inlined_call_operand.vmem [shape: bf16[16,128], index: 9, kind: input, shape index: {}]
  %s10 = inlined_call_operand.vmem [shape: f32[1,128], index: 10, kind: input, shape index: {}]
  %s11 = inlined_call_operand.vmem [shape: bf16[128,128], index: 11, kind: input, shape index: {}]
  %s12 = inlined_call_operand.vmem [shape: f32[1,128], index: 12, kind: input, shape index: {}]
  %s13 = inlined_call_operand.vmem [shape: bf16[128,128], index: 13, kind: input, shape index: {}]
  %s14 = inlined_call_operand.vmem [shape: f32[1,128], index: 14, kind: input, shape index: {}]
  %s15 = inlined_call_operand.vmem [shape: bf16[128,128], index: 15, kind: input, shape index: {}]
  %s16 = inlined_call_operand.vmem [shape: f32[1,128], index: 16, kind: input, shape index: {}]
  %s17 = inlined_call_operand.vmem [shape: f32[32,128], index: 17, kind: output, shape index: {}]
  %s18 = sld [smem:[#allocation0]]
  $region101: #{fused_mlp_forward.1} parent=0
    _
  %s20 = ssub.s32 1, %s18
  %s21 = scalar_select 0, %s20, %s18
  loop: start=0, step=1, limit=4
  $region2: #{fused_mlp_forward.1} parent=0 // loop_pre_header
    _
  $region3: #{fused_mlp_forward.1} parent=0 // loop_header
    %s23 = sphi 0, %s27
    %p24 = scmp.ge.s32.totalorder %s23, 4
    %s33 = sphi 0, %s35
    %s36 = sphi 0, %s33
    %s37 = sphi 0, %s36
    %s53 = sphi 0, %s37
    %s57 = sphi 0, %s57
    %s59 = sphi 0, %s57
    %s60 = sphi 0, %s59
    %s74 = sphi 0, %s60
    %s78 = sphi 0, %s78
    %s80 = sphi 0, %s78
    %s81 = sphi 0, %s80
    %s95 = sphi 0, %s81
    %s99 = sphi 0, %s99
    %s101 = sphi 0, %s99
    %s102 = sphi 0, %s101
    %s116 = sphi 0, %s102
    %s120 = sphi 0, %s120
    %s122 = sphi 0, %s120
    %s123 = sphi 0, %s122
    %s137 = sphi 0, %s123
    %s141 = sphi 0, %s141
    %s143 = sphi 0, %s141
    %s144 = sphi 0, %s143
    %s158 = sphi 0, %s144
    %s162 = sphi 0, %s162
    %s164 = sphi 0, %s162
    %s165 = sphi 0, %s164
    %s179 = sphi 0, %s165
    %s183 = sphi 0, %s183
    %s185 = sphi 0, %s183
    %s186 = sphi 0, %s185
    %s200 = sphi 0, %s186
    %s204 = sphi 0, %s204
    %s206 = sphi 0, %s204
    %s207 = sphi 0, %s206
    %s221 = sphi 0, %s207
    %s225 = sphi 0, %s225
    %s227 = sphi 0, %s225
    %s228 = sphi 0, %s227
    %s242 = sphi 0, %s228
    %s246 = sphi 0, %s246
    %s248 = sphi 0, %s246
    %s249 = sphi 0, %s248
    %s263 = sphi 0, %s249
    %s267 = sphi 0, %s267
    %s269 = sphi 0, %s267
    %s270 = sphi 0, %s269
    %s284 = sphi 0, %s270
    %s288 = sphi 0, %s288
    %s290 = sphi 0, %s288
    %s291 = sphi 0, %s290
    %s305 = sphi 0, %s291
    %s309 = sphi 0, %s309
    %s311 = sphi 0, %s309
    %s312 = sphi 0, %s311
    %s326 = sphi 0, %s312
    %s330 = sphi 0, %s330
    %s332 = sphi 0, %s330
    %s333 = sphi 0, %s332
    %s347 = sphi 0, %s333
    %s351 = sphi 0, %s351
    %s353 = sphi 0, %s351
    %s354 = sphi 0, %s353
    %s368 = sphi 0, %s354
    %s372 = sphi 0, %s372
    %s374 = sphi 0, %s372
    %s375 = sphi 0, %s374
    %s389 = sphi 0, %s375
    %s395 = sphi 0, %s397
    %s398 = sphi 0, %s395
    %s399 = sphi 0, %s398
    %s415 = sphi 0, %s399
  $region4: #{fused_mlp_forward.1} parent=0 // loop_header_branch
    %26 = sbr.rel (%p24) target = $region8
  $region5: #{fused_mlp_forward.1} parent=0 // loop_body
    %s28 = ssub.s32 %s23, 1
    %s29 = ssub.s32 %s23, 2
    %s30 = sadd.s32 %s23, 1
    %s31 = ssub.s32 %s23, %s30
    %p32 = scmp.eq.s32.totalorder %s31, 0
    %s34 = sadd.s32 %s33, 1
    %s35 = scalar_select %p32, %s33, %s34
    %p38 = pneg %p32
    %p39 = scmp.eq.s32.totalorder %s23, 1
    %p40 = por %p38, %p39
    %p41 = scmp.ne.s32.totalorder %s33, %s36
    %p42 = scmp.eq.s32.totalorder %s23, 0
    %p43 = por %p41, %p42
    %p44 = scmp.ne.s32.totalorder %s33, %s36
    %p45 = scmp.eq.s32.totalorder %s28, 1
    %p46 = por %p44, %p45
    %p47 = scmp.ne.s32.totalorder %s36, %s37
    %p48 = scmp.eq.s32.totalorder %s28, 0
    %p49 = por %p47, %p48
    %p50 = scmp.ne.s32.totalorder %s36, %s37
    %p51 = scmp.eq.s32.totalorder %s29, 1
    %p52 = por %p50, %p51
    %p54 = scmp.ne.s32.totalorder %s37, %s53
    %p55 = scmp.eq.s32.totalorder %s29, 0
    %p56 = por %p54, %p55
    %s58 = sadd.s32 %s57, 1
    %p61 = scmp.eq.s32.totalorder %s23, 1
    %p62 = scmp.ne.s32.totalorder %s57, %s59
    %p63 = scmp.eq.s32.totalorder %s23, 0
    %p64 = por %p62, %p63
    %p65 = scmp.ne.s32.totalorder %s57, %s59
    %p66 = scmp.eq.s32.totalorder %s28, 1
    %p67 = por %p65, %p66
    %p68 = scmp.ne.s32.totalorder %s59, %s60
    %p69 = scmp.eq.s32.totalorder %s28, 0
    %p70 = por %p68, %p69
    %p71 = scmp.ne.s32.totalorder %s59, %s60
    %p72 = scmp.eq.s32.totalorder %s29, 1
    %p73 = por %p71, %p72
    %p75 = scmp.ne.s32.totalorder %s60, %s74
    %p76 = scmp.eq.s32.totalorder %s29, 0
    %p77 = por %p75, %p76
    %s79 = sadd.s32 %s78, 1
    %p82 = scmp.eq.s32.totalorder %s23, 1
    %p83 = scmp.ne.s32.totalorder %s78, %s80
    %p84 = scmp.eq.s32.totalorder %s23, 0
    %p85 = por %p83, %p84
    %p86 = scmp.ne.s32.totalorder %s78, %s80
    %p87 = scmp.eq.s32.totalorder %s28, 1
    %p88 = por %p86, %p87
    %p89 = scmp.ne.s32.totalorder %s80, %s81
    %p90 = scmp.eq.s32.totalorder %s28, 0
    %p91 = por %p89, %p90
    %p92 = scmp.ne.s32.totalorder %s80, %s81
    %p93 = scmp.eq.s32.totalorder %s29, 1
    %p94 = por %p92, %p93
    %p96 = scmp.ne.s32.totalorder %s81, %s95
    %p97 = scmp.eq.s32.totalorder %s29, 0
    %p98 = por %p96, %p97
    %s100 = sadd.s32 %s99, 1
    %p103 = scmp.eq.s32.totalorder %s23, 1
    %p104 = scmp.ne.s32.totalorder %s99, %s101
    %p105 = scmp.eq.s32.totalorder %s23, 0
    %p106 = por %p104, %p105
    %p107 = scmp.ne.s32.totalorder %s99, %s101
    %p108 = scmp.eq.s32.totalorder %s28, 1
    %p109 = por %p107, %p108
    %p110 = scmp.ne.s32.totalorder %s101, %s102
    %p111 = scmp.eq.s32.totalorder %s28, 0
    %p112 = por %p110, %p111
    %p113 = scmp.ne.s32.totalorder %s101, %s102
    %p114 = scmp.eq.s32.totalorder %s29, 1
    %p115 = por %p113, %p114
    %p117 = scmp.ne.s32.totalorder %s102, %s116
    %p118 = scmp.eq.s32.totalorder %s29, 0
    %p119 = por %p117, %p118
    %s121 = sadd.s32 %s120, 1
    %p124 = scmp.eq.s32.totalorder %s23, 1
    %p125 = scmp.ne.s32.totalorder %s120, %s122
    %p126 = scmp.eq.s32.totalorder %s23, 0
    %p127 = por %p125, %p126
    %p128 = scmp.ne.s32.totalorder %s120, %s122
    %p129 = scmp.eq.s32.totalorder %s28, 1
    %p130 = por %p128, %p129
    %p131 = scmp.ne.s32.totalorder %s122, %s123
    %p132 = scmp.eq.s32.totalorder %s28, 0
    %p133 = por %p131, %p132
    %p134 = scmp.ne.s32.totalorder %s122, %s123
    %p135 = scmp.eq.s32.totalorder %s29, 1
    %p136 = por %p134, %p135
    %p138 = scmp.ne.s32.totalorder %s123, %s137
    %p139 = scmp.eq.s32.totalorder %s29, 0
    %p140 = por %p138, %p139
    %s142 = sadd.s32 %s141, 1
    %p145 = scmp.eq.s32.totalorder %s23, 1
    %p146 = scmp.ne.s32.totalorder %s141, %s143
    %p147 = scmp.eq.s32.totalorder %s23, 0
    %p148 = por %p146, %p147
    %p149 = scmp.ne.s32.totalorder %s141, %s143
    %p150 = scmp.eq.s32.totalorder %s28, 1
    %p151 = por %p149, %p150
    %p152 = scmp.ne.s32.totalorder %s143, %s144
    %p153 = scmp.eq.s32.totalorder %s28, 0
    %p154 = por %p152, %p153
    %p155 = scmp.ne.s32.totalorder %s143, %s144
    %p156 = scmp.eq.s32.totalorder %s29, 1
    %p157 = por %p155, %p156
    %p159 = scmp.ne.s32.totalorder %s144, %s158
    %p160 = scmp.eq.s32.totalorder %s29, 0
    %p161 = por %p159, %p160
    %s163 = sadd.s32 %s162, 1
    %p166 = scmp.eq.s32.totalorder %s23, 1
    %p167 = scmp.ne.s32.totalorder %s162, %s164
    %p168 = scmp.eq.s32.totalorder %s23, 0
    %p169 = por %p167, %p168
    %p170 = scmp.ne.s32.totalorder %s162, %s164
    %p171 = scmp.eq.s32.totalorder %s28, 1
    %p172 = por %p170, %p171
    %p173 = scmp.ne.s32.totalorder %s164, %s165
    %p174 = scmp.eq.s32.totalorder %s28, 0
    %p175 = por %p173, %p174
    %p176 = scmp.ne.s32.totalorder %s164, %s165
    %p177 = scmp.eq.s32.totalorder %s29, 1
    %p178 = por %p176, %p177
    %p180 = scmp.ne.s32.totalorder %s165, %s179
    %p181 = scmp.eq.s32.totalorder %s29, 0
    %p182 = por %p180, %p181
    %s184 = sadd.s32 %s183, 1
    %p187 = scmp.eq.s32.totalorder %s23, 1
    %p188 = scmp.ne.s32.totalorder %s183, %s185
    %p189 = scmp.eq.s32.totalorder %s23, 0
    %p190 = por %p188, %p189
    %p191 = scmp.ne.s32.totalorder %s183, %s185
    %p192 = scmp.eq.s32.totalorder %s28, 1
    %p193 = por %p191, %p192
    %p194 = scmp.ne.s32.totalorder %s185, %s186
    %p195 = scmp.eq.s32.totalorder %s28, 0
    %p196 = por %p194, %p195
    %p197 = scmp.ne.s32.totalorder %s185, %s186
    %p198 = scmp.eq.s32.totalorder %s29, 1
    %p199 = por %p197, %p198
    %p201 = scmp.ne.s32.totalorder %s186, %s200
    %p202 = scmp.eq.s32.totalorder %s29, 0
    %p203 = por %p201, %p202
    %s205 = sadd.s32 %s204, 1
    %p208 = scmp.eq.s32.totalorder %s23, 1
    %p209 = scmp.ne.s32.totalorder %s204, %s206
    %p210 = scmp.eq.s32.totalorder %s23, 0
    %p211 = por %p209, %p210
    %p212 = scmp.ne.s32.totalorder %s204, %s206
    %p213 = scmp.eq.s32.totalorder %s28, 1
    %p214 = por %p212, %p213
    %p215 = scmp.ne.s32.totalorder %s206, %s207
    %p216 = scmp.eq.s32.totalorder %s28, 0
    %p217 = por %p215, %p216
    %p218 = scmp.ne.s32.totalorder %s206, %s207
    %p219 = scmp.eq.s32.totalorder %s29, 1
    %p220 = por %p218, %p219
    %p222 = scmp.ne.s32.totalorder %s207, %s221
    %p223 = scmp.eq.s32.totalorder %s29, 0
    %p224 = por %p222, %p223
    %s226 = sadd.s32 %s225, 1
    %p229 = scmp.eq.s32.totalorder %s23, 1
    %p230 = scmp.ne.s32.totalorder %s225, %s227
    %p231 = scmp.eq.s32.totalorder %s23, 0
    %p232 = por %p230, %p231
    %p233 = scmp.ne.s32.totalorder %s225, %s227
    %p234 = scmp.eq.s32.totalorder %s28, 1
    %p235 = por %p233, %p234
    %p236 = scmp.ne.s32.totalorder %s227, %s228
    %p237 = scmp.eq.s32.totalorder %s28, 0
    %p238 = por %p236, %p237
    %p239 = scmp.ne.s32.totalorder %s227, %s228
    %p240 = scmp.eq.s32.totalorder %s29, 1
    %p241 = por %p239, %p240
    %p243 = scmp.ne.s32.totalorder %s228, %s242
    %p244 = scmp.eq.s32.totalorder %s29, 0
    %p245 = por %p243, %p244
    %s247 = sadd.s32 %s246, 1
    %p250 = scmp.eq.s32.totalorder %s23, 1
    %p251 = scmp.ne.s32.totalorder %s246, %s248
    %p252 = scmp.eq.s32.totalorder %s23, 0
    %p253 = por %p251, %p252
    %p254 = scmp.ne.s32.totalorder %s246, %s248
    %p255 = scmp.eq.s32.totalorder %s28, 1
    %p256 = por %p254, %p255
    %p257 = scmp.ne.s32.totalorder %s248, %s249
    %p258 = scmp.eq.s32.totalorder %s28, 0
    %p259 = por %p257, %p258
    %p260 = scmp.ne.s32.totalorder %s248, %s249
    %p261 = scmp.eq.s32.totalorder %s29, 1
    %p262 = por %p260, %p261
    %p264 = scmp.ne.s32.totalorder %s249, %s263
    %p265 = scmp.eq.s32.totalorder %s29, 0
    %p266 = por %p264, %p265
    %s268 = sadd.s32 %s267, 1
    %p271 = scmp.eq.s32.totalorder %s23, 1
    %p272 = scmp.ne.s32.totalorder %s267, %s269
    %p273 = scmp.eq.s32.totalorder %s23, 0
    %p274 = por %p272, %p273
    %p275 = scmp.ne.s32.totalorder %s267, %s269
    %p276 = scmp.eq.s32.totalorder %s28, 1
    %p277 = por %p275, %p276
    %p278 = scmp.ne.s32.totalorder %s269, %s270
    %p279 = scmp.eq.s32.totalorder %s28, 0
    %p280 = por %p278, %p279
    %p281 = scmp.ne.s32.totalorder %s269, %s270
    %p282 = scmp.eq.s32.totalorder %s29, 1
    %p283 = por %p281, %p282
    %p285 = scmp.ne.s32.totalorder %s270, %s284
    %p286 = scmp.eq.s32.totalorder %s29, 0
    %p287 = por %p285, %p286
    %s289 = sadd.s32 %s288, 1
    %p292 = scmp.eq.s32.totalorder %s23, 1
    %p293 = scmp.ne.s32.totalorder %s288, %s290
    %p294 = scmp.eq.s32.totalorder %s23, 0
    %p295 = por %p293, %p294
    %p296 = scmp.ne.s32.totalorder %s288, %s290
    %p297 = scmp.eq.s32.totalorder %s28, 1
    %p298 = por %p296, %p297
    %p299 = scmp.ne.s32.totalorder %s290, %s291
    %p300 = scmp.eq.s32.totalorder %s28, 0
    %p301 = por %p299, %p300
    %p302 = scmp.ne.s32.totalorder %s290, %s291
    %p303 = scmp.eq.s32.totalorder %s29, 1
    %p304 = por %p302, %p303
    %p306 = scmp.ne.s32.totalorder %s291, %s305
    %p307 = scmp.eq.s32.totalorder %s29, 0
    %p308 = por %p306, %p307
    %s310 = sadd.s32 %s309, 1
    %p313 = scmp.eq.s32.totalorder %s23, 1
    %p314 = scmp.ne.s32.totalorder %s309, %s311
    %p315 = scmp.eq.s32.totalorder %s23, 0
    %p316 = por %p314, %p315
    %p317 = scmp.ne.s32.totalorder %s309, %s311
    %p318 = scmp.eq.s32.totalorder %s28, 1
    %p319 = por %p317, %p318
    %p320 = scmp.ne.s32.totalorder %s311, %s312
    %p321 = scmp.eq.s32.totalorder %s28, 0
    %p322 = por %p320, %p321
    %p323 = scmp.ne.s32.totalorder %s311, %s312
    %p324 = scmp.eq.s32.totalorder %s29, 1
    %p325 = por %p323, %p324
    %p327 = scmp.ne.s32.totalorder %s312, %s326
    %p328 = scmp.eq.s32.totalorder %s29, 0
    %p329 = por %p327, %p328
    %s331 = sadd.s32 %s330, 1
    %p334 = scmp.eq.s32.totalorder %s23, 1
    %p335 = scmp.ne.s32.totalorder %s330, %s332
    %p336 = scmp.eq.s32.totalorder %s23, 0
    %p337 = por %p335, %p336
    %p338 = scmp.ne.s32.totalorder %s330, %s332
    %p339 = scmp.eq.s32.totalorder %s28, 1
    %p340 = por %p338, %p339
    %p341 = scmp.ne.s32.totalorder %s332, %s333
    %p342 = scmp.eq.s32.totalorder %s28, 0
    %p343 = por %p341, %p342
    %p344 = scmp.ne.s32.totalorder %s332, %s333
    %p345 = scmp.eq.s32.totalorder %s29, 1
    %p346 = por %p344, %p345
    %p348 = scmp.ne.s32.totalorder %s333, %s347
    %p349 = scmp.eq.s32.totalorder %s29, 0
    %p350 = por %p348, %p349
    %s352 = sadd.s32 %s351, 1
    %p355 = scmp.eq.s32.totalorder %s23, 1
    %p356 = scmp.ne.s32.totalorder %s351, %s353
    %p357 = scmp.eq.s32.totalorder %s23, 0
    %p358 = por %p356, %p357
    %p359 = scmp.ne.s32.totalorder %s351, %s353
    %p360 = scmp.eq.s32.totalorder %s28, 1
    %p361 = por %p359, %p360
    %p362 = scmp.ne.s32.totalorder %s353, %s354
    %p363 = scmp.eq.s32.totalorder %s28, 0
    %p364 = por %p362, %p363
    %p365 = scmp.ne.s32.totalorder %s353, %s354
    %p366 = scmp.eq.s32.totalorder %s29, 1
    %p367 = por %p365, %p366
    %p369 = scmp.ne.s32.totalorder %s354, %s368
    %p370 = scmp.eq.s32.totalorder %s29, 0
    %p371 = por %p369, %p370
    %s373 = sadd.s32 %s372, 1
    %p376 = scmp.eq.s32.totalorder %s23, 1
    %p377 = scmp.ne.s32.totalorder %s372, %s374
    %p378 = scmp.eq.s32.totalorder %s23, 0
    %p379 = por %p377, %p378
    %p380 = scmp.ne.s32.totalorder %s372, %s374
    %p381 = scmp.eq.s32.totalorder %s28, 1
    %p382 = por %p380, %p381
    %p383 = scmp.ne.s32.totalorder %s374, %s375
    %p384 = scmp.eq.s32.totalorder %s28, 0
    %p385 = por %p383, %p384
    %p386 = scmp.ne.s32.totalorder %s374, %s375
    %p387 = scmp.eq.s32.totalorder %s29, 1
    %p388 = por %p386, %p387
    %p390 = scmp.ne.s32.totalorder %s375, %s389
    %p391 = scmp.eq.s32.totalorder %s29, 0
    %p392 = por %p390, %p391
    %s393 = ssub.s32 %s23, %s30
    %p394 = scmp.eq.s32.totalorder %s393, 0
    %s396 = sadd.s32 %s395, 1
    %s397 = scalar_select %p394, %s395, %s396
    %p400 = pneg %p394
    %p401 = scmp.eq.s32.totalorder %s23, 1
    %p402 = por %p400, %p401
    %p403 = scmp.ne.s32.totalorder %s395, %s398
    %p404 = scmp.eq.s32.totalorder %s23, 0
    %p405 = por %p403, %p404
    %p406 = scmp.ne.s32.totalorder %s395, %s398
    %p407 = scmp.eq.s32.totalorder %s28, 1
    %p408 = por %p406, %p407
    %p409 = scmp.ne.s32.totalorder %s398, %s399
    %p410 = scmp.eq.s32.totalorder %s28, 0
    %p411 = por %p409, %p410
    %p412 = scmp.ne.s32.totalorder %s398, %s399
    %p413 = scmp.eq.s32.totalorder %s29, 1
    %p414 = por %p412, %p413
    %p416 = scmp.ne.s32.totalorder %s399, %s415
    %p417 = scmp.eq.s32.totalorder %s29, 0
    %p418 = por %p416, %p417
    %p419 = scmp.le.s32.totalorder 1, %s23
    %p420 = scmp.lt.s32.totalorder %s23, 3
    %p421 = pnand %p419, %p420
    %p422 = pneg %p421
    // Predicated region
    $region9: #{fused_mlp_forward.1} parent=5 // pred_check
      _
    $region10: #{fused_mlp_forward.1} parent=5 // pred_check_branch
      %424 = sbr.rel (%p421) target = $region12
    $region11: #{fused_mlp_forward.1} parent=5 // pred_region
      %s425 = ssub.s32 %s23, 1
      // Predicated region
      $region13: #{fused_mlp_forward.1} parent=11 // pred_check
        %p426 = pneg %p70
      $region14: #{fused_mlp_forward.1} parent=11 // pred_check_branch
        %428 = sbr.rel (%p426) target = $region16
      $region15: #{fused_mlp_forward.1} parent=11 // pred_region
        _
      $region16: #{fused_mlp_forward.1} parent=11 // pred_fallthru
        _
      // Predicated region
      $region17: #{fused_mlp_forward.1} parent=11 // pred_check
        %p429 = pneg %p91
      $region18: #{fused_mlp_forward.1} parent=11 // pred_check_branch
        %431 = sbr.rel (%p429) target = $region20
      $region19: #{fused_mlp_forward.1} parent=11 // pred_region
        _
      $region20: #{fused_mlp_forward.1} parent=11 // pred_fallthru
        _
      // Predicated region
      $region21: #{fused_mlp_forward.1} parent=11 // pred_check
        %p432 = pneg %p112
      $region22: #{fused_mlp_forward.1} parent=11 // pred_check_branch
        %434 = sbr.rel (%p432) target = $region24
      $region23: #{fused_mlp_forward.1} parent=11 // pred_region
        _
      $region24: #{fused_mlp_forward.1} parent=11 // pred_fallthru
        _
      // Predicated region
      $region25: #{fused_mlp_forward.1} parent=11 // pred_check
        %p435 = pneg %p133
      $region26: #{fused_mlp_forward.1} parent=11 // pred_check_branch
        %437 = sbr.rel (%p435) target = $region28
      $region27: #{fused_mlp_forward.1} parent=11 // pred_region
        _
      $region28: #{fused_mlp_forward.1} parent=11 // pred_fallthru
        _
      // Predicated region
      $region29: #{fused_mlp_forward.1} parent=11 // pred_check
        %p438 = pneg %p154
      $region30: #{fused_mlp_forward.1} parent=11 // pred_check_branch
        %440 = sbr.rel (%p438) target = $region32
      $region31: #{fused_mlp_forward.1} parent=11 // pred_region
        _
      $region32: #{fused_mlp_forward.1} parent=11 // pred_fallthru
        _
      // Predicated region
      $region33: #{fused_mlp_forward.1} parent=11 // pred_check
        %p441 = pneg %p175
      $region34: #{fused_mlp_forward.1} parent=11 // pred_check_branch
        %443 = sbr.rel (%p441) target = $region36
      $region35: #{fused_mlp_forward.1} parent=11 // pred_region
        _
      $region36: #{fused_mlp_forward.1} parent=11 // pred_fallthru
        _
      // Predicated region
      $region37: #{fused_mlp_forward.1} parent=11 // pred_check
        %p444 = pneg %p196
      $region38: #{fused_mlp_forward.1} parent=11 // pred_check_branch
        %446 = sbr.rel (%p444) target = $region40
      $region39: #{fused_mlp_forward.1} parent=11 // pred_region
        _
      $region40: #{fused_mlp_forward.1} parent=11 // pred_fallthru
        _
      // Predicated region
      $region41: #{fused_mlp_forward.1} parent=11 // pred_check
        %p447 = pneg %p217
      $region42: #{fused_mlp_forward.1} parent=11 // pred_check_branch
        %449 = sbr.rel (%p447) target = $region44
      $region43: #{fused_mlp_forward.1} parent=11 // pred_region
        _
      $region44: #{fused_mlp_forward.1} parent=11 // pred_fallthru
        _
      // Predicated region
      $region45: #{fused_mlp_forward.1} parent=11 // pred_check
        %p450 = pneg %p238
      $region46: #{fused_mlp_forward.1} parent=11 // pred_check_branch
        %452 = sbr.rel (%p450) target = $region48
      $region47: #{fused_mlp_forward.1} parent=11 // pred_region
        _
      $region48: #{fused_mlp_forward.1} parent=11 // pred_fallthru
        _
      // Predicated region
      $region49: #{fused_mlp_forward.1} parent=11 // pred_check
        %p453 = pneg %p259
      $region50: #{fused_mlp_forward.1} parent=11 // pred_check_branch
        %455 = sbr.rel (%p453) target = $region52
      $region51: #{fused_mlp_forward.1} parent=11 // pred_region
        _
      $region52: #{fused_mlp_forward.1} parent=11 // pred_fallthru
        _
      // Predicated region
      $region53: #{fused_mlp_forward.1} parent=11 // pred_check
        %p456 = pneg %p280
      $region54: #{fused_mlp_forward.1} parent=11 // pred_check_branch
        %458 = sbr.rel (%p456) target = $region56
      $region55: #{fused_mlp_forward.1} parent=11 // pred_region
        _
      $region56: #{fused_mlp_forward.1} parent=11 // pred_fallthru
        _
      // Predicated region
      $region57: #{fused_mlp_forward.1} parent=11 // pred_check
        %p459 = pneg %p301
      $region58: #{fused_mlp_forward.1} parent=11 // pred_check_branch
        %461 = sbr.rel (%p459) target = $region60
      $region59: #{fused_mlp_forward.1} parent=11 // pred_region
        _
      $region60: #{fused_mlp_forward.1} parent=11 // pred_fallthru
        _
      // Predicated region
      $region61: #{fused_mlp_forward.1} parent=11 // pred_check
        %p462 = pneg %p322
      $region62: #{fused_mlp_forward.1} parent=11 // pred_check_branch
        %464 = sbr.rel (%p462) target = $region64
      $region63: #{fused_mlp_forward.1} parent=11 // pred_region
        _
      $region64: #{fused_mlp_forward.1} parent=11 // pred_fallthru
        _
      // Predicated region
      $region65: #{fused_mlp_forward.1} parent=11 // pred_check
        %p465 = pneg %p343
      $region66: #{fused_mlp_forward.1} parent=11 // pred_check_branch
        %467 = sbr.rel (%p465) target = $region68
      $region67: #{fused_mlp_forward.1} parent=11 // pred_region
        _
      $region68: #{fused_mlp_forward.1} parent=11 // pred_fallthru
        _
      // Predicated region
      $region69: #{fused_mlp_forward.1} parent=11 // pred_check
        %p468 = pneg %p364
      $region70: #{fused_mlp_forward.1} parent=11 // pred_check_branch
        %470 = sbr.rel (%p468) target = $region72
      $region71: #{fused_mlp_forward.1} parent=11 // pred_region
        _
      $region72: #{fused_mlp_forward.1} parent=11 // pred_fallthru
        _
      // Predicated region
      $region73: #{fused_mlp_forward.1} parent=11 // pred_check
        %p471 = pneg %p385
      $region74: #{fused_mlp_forward.1} parent=11 // pred_check_branch
        %473 = sbr.rel (%p471) target = $region76
      $region75: #{fused_mlp_forward.1} parent=11 // pred_region
        _
      $region76: #{fused_mlp_forward.1} parent=11 // pred_fallthru
        _
    $region12: #{fused_mlp_forward.1} parent=5 // pred_fallthru
      _
    %p474 = scmp.lt.s32.totalorder %s23, 2
    // Predicated region
    $region77: #{fused_mlp_forward.1} parent=5 // pred_check
      %p475 = pneg %p474
    $region78: #{fused_mlp_forward.1} parent=5 // pred_check_branch
      %477 = sbr.rel (%p475) target = $region80
    $region79: #{fused_mlp_forward.1} parent=5 // pred_region
      // Predicated region
      $region81: #{fused_mlp_forward.1} parent=79 // pred_check
        %p478 = pneg %p43
      $region82: #{fused_mlp_forward.1} parent=79 // pred_check_branch
        %480 = sbr.rel (%p478) target = $region84
      $region83: #{fused_mlp_forward.1} parent=79 // pred_region
        %s481 = smul.u32 2, %s23
        %p482 = scmp.lt.s32.totalorder %s481, 3
        %s483 = scalar_select %p482, %s481, 3
        %s484 = smul.addr %s483, 4
        %s485 = scalar_lea.vmem %s0, %s484
        %s486 = smul.u32 2, %s23
      $region84: #{fused_mlp_forward.1} parent=79 // pred_fallthru
        _
    $region80: #{fused_mlp_forward.1} parent=5 // pred_fallthru
      _
    %p487 = scmp.le.s32.totalorder 1, %s23
    %p488 = scmp.lt.s32.totalorder %s23, 3
    %p489 = pnand %p487, %p488
    %p490 = pneg %p489
    // Predicated region
    $region85: #{fused_mlp_forward.1} parent=5 // pred_check
      _
    $region86: #{fused_mlp_forward.1} parent=5 // pred_check_branch
      %492 = sbr.rel (%p489) target = $region88
    $region87: #{fused_mlp_forward.1} parent=5 // pred_region
      %s493 = ssub.s32 %s23, 1
      %s494 = smul.u32 2, %s28
      %p495 = scmp.lt.s32.totalorder %s494, 3
      %s496 = scalar_select %p495, %s494, 3
      %s497 = smul.addr %s496, 4
      %s498 = scalar_lea.vmem %s0, %s497
      %p499 = pneg %p49
      %p500 = pneg %p46
      %p501 = pneg %p70
      %p502 = pneg %p67
      %p503 = pneg %p91
      %p504 = pneg %p88
      %p505 = pneg %p112
      %p506 = pneg %p109
      %p507 = pneg %p133
      %p508 = pneg %p130
      %p509 = pneg %p154
      %p510 = pneg %p151
      %p511 = pneg %p175
      %p512 = pneg %p172
      %p513 = pneg %p196
      %p514 = pneg %p193
      %p515 = pneg %p217
      %p516 = pneg %p214
      %p517 = pneg %p238
      %p518 = pneg %p235
      %p519 = pneg %p259
      %p520 = pneg %p256
      %p521 = pneg %p280
      %p522 = pneg %p277
      %p523 = pneg %p301
      %p524 = pneg %p298
      %p525 = pneg %p322
      %p526 = pneg %p319
      %p527 = pneg %p343
      %p528 = pneg %p340
      %p529 = pneg %p364
      %p530 = pneg %p361
      %p531 = pneg %p385
      %p532 = pneg %p382
      %p533 = pneg %p411
      %p534 = pneg %p408
      %s535 = smul.u32 2, %s28
      %p536 = scmp.lt.s32.totalorder %s535, 3
      %s537 = scalar_select %p536, %s535, 3
      %s538 = smul.addr %s537, 8
      %s539 = scalar_lea.vmem %s17, %s538
      %s540 = smul.u32 2, %s28
      %p541 = scmp.lt.s32.totalorder %s540, 3
      %s542 = scalar_select %p541, %s540, 3
      %s543 = smul.addr %s542, 4
      %s544 = scalar_lea.vmem %s0, %s543
      %s545 = smul.u32 2, %s28
      %s546 = smul.u32 2, %s28
      %p547 = scmp.lt.s32.totalorder %s546, 3
      %s548 = scalar_select %p547, %s546, 3
      %s549 = smul.addr %s548, 8
      %s550 = scalar_lea.vmem %s17, %s549
      %s551 = smul.u32 2, %s28
      %v553 = vld [vmem:[%s544] sm:$0xf]
      %v554 = vld [vmem:[%s544 + $0x4] sm:$0xf]
      %v555 = vld [vmem:[%s1] sm:$0xf]
      %v556 = vld [vmem:[%s1 + $0x4] sm:$0xf]
      %v557 = vld [vmem:[%s2] sm:$0x1]
      %v558 = vld [vmem:[%s3] sm:$0xf]
      %v559 = vld [vmem:[%s3 + $0x4] sm:$0xf]
      %v560 = vld [vmem:[%s3 + $0x8] sm:$0xf]
      %v561 = vld [vmem:[%s3 + $0xc] sm:$0xf]
      %v562 = vld [vmem:[%s3 + $0x10] sm:$0xf]
      %v563 = vld [vmem:[%s3 + $0x14] sm:$0xf]
      %v564 = vld [vmem:[%s3 + $0x18] sm:$0xf]
      %v565 = vld [vmem:[%s3 + $0x1c] sm:$0xf]
      %v566 = vld [vmem:[%s3 + $0x20] sm:$0xf]
      %v567 = vld [vmem:[%s3 + $0x24] sm:$0xf]
      %v568 = vld [vmem:[%s3 + $0x28] sm:$0xf]
      %v569 = vld [vmem:[%s3 + $0x2c] sm:$0xf]
      %v570 = vld [vmem:[%s3 + $0x30] sm:$0xf]
      %v571 = vld [vmem:[%s3 + $0x34] sm:$0xf]
      %v572 = vld [vmem:[%s3 + $0x38] sm:$0xf]
      %v573 = vld [vmem:[%s3 + $0x3c] sm:$0xf]
      %v574 = vld [vmem:[%s4] sm:$0x1]
      %v575 = vld [vmem:[%s5] sm:$0xf]
      %v576 = vld [vmem:[%s5 + $0x4] sm:$0xf]
      %v577 = vld [vmem:[%s5 + $0x8] sm:$0xf]
      %v578 = vld [vmem:[%s5 + $0xc] sm:$0xf]
      %v579 = vld [vmem:[%s5 + $0x10] sm:$0xf]
      %v580 = vld [vmem:[%s5 + $0x14] sm:$0xf]
      %v581 = vld [vmem:[%s5 + $0x18] sm:$0xf]
      %v582 = vld [vmem:[%s5 + $0x1c] sm:$0xf]
      %v583 = vld [vmem:[%s5 + $0x20] sm:$0xf]
      %v584 = vld [vmem:[%s5 + $0x24] sm:$0xf]
      %v585 = vld [vmem:[%s5 + $0x28] sm:$0xf]
      %v586 = vld [vmem:[%s5 + $0x2c] sm:$0xf]
      %v587 = vld [vmem:[%s5 + $0x30] sm:$0xf]
      %v588 = vld [vmem:[%s5 + $0x34] sm:$0xf]
      %v589 = vld [vmem:[%s5 + $0x38] sm:$0xf]
      %v590 = vld [vmem:[%s5 + $0x3c] sm:$0xf]
      %v591 = vld [vmem:[%s6] sm:$0x1]
      %v592 = vld [vmem:[%s7] sm:$0xf]
      %v593 = vld [vmem:[%s7 + $0x4] sm:$0xf]
      %v594 = vld [vmem:[%s7 + $0x8] sm:$0xf]
      %v595 = vld [vmem:[%s7 + $0xc] sm:$0xf]
      %v596 = vld [vmem:[%s7 + $0x10] sm:$0xf]
      %v597 = vld [vmem:[%s7 + $0x14] sm:$0xf]
      %v598 = vld [vmem:[%s7 + $0x18] sm:$0xf]
      %v599 = vld [vmem:[%s7 + $0x1c] sm:$0xf]
      %v600 = vld [vmem:[%s7 + $0x20] sm:$0xf]
      %v601 = vld [vmem:[%s7 + $0x24] sm:$0xf]
      %v602 = vld [vmem:[%s7 + $0x28] sm:$0xf]
      %v603 = vld [vmem:[%s7 + $0x2c] sm:$0xf]
      %v604 = vld [vmem:[%s7 + $0x30] sm:$0xf]
      %v605 = vld [vmem:[%s7 + $0x34] sm:$0xf]
      %v606 = vld [vmem:[%s7 + $0x38] sm:$0xf]
      %v607 = vld [vmem:[%s7 + $0x3c] sm:$0xf]
      %v608 = vld [vmem:[%s8] sm:$0x1]
      %v610 = vlaneseq
      %v611 = vshrl.u32 %v610, 7
      %v612 = vsub.s32 0, %v611
      %v613 = vrot.slane %v557, %v612
      %v617 = vunpack.c.l.b16 %v553
      %v618 = vunpack.c.l.b16 %v554
      %v619 = vpack.c.b16 %v618, %v617
      %v622 = vunpack.c.l.b16 %v555
      %v623 = vunpack.c.l.b16 %v556
      %v624 = vpack.c.b16 %v623, %v622
      %vm626 = vcmask 130048
      %v628 = vsel %vm626, %v619, 0
      %630 = vmatprep.subr.bf16.mxu0 0
      %631 = vmatpush1.bf16.msra.mxu0 %v624
      %632 = vmatprep.subr.bf16.mxu0 0
      %633 = vmatpush1.bf16.msra.mxu0 0
      %634 = vmatprep.subr.bf16.mxu0 0
      %635 = vmatpush1.bf16.msra.mxu0 0
      %636 = vmatprep.subr.bf16.mxu0 0
      %637 = vmatpush1.bf16.msra.mxu0 0
      %638 = vmatprep.subr.bf16.mxu0 0
      %639 = vmatpush1.bf16.msra.mxu0 0
      %640 = vmatprep.subr.bf16.mxu0 0
      %641 = vmatpush1.bf16.msra.mxu0 0
      %642 = vmatprep.subr.bf16.mxu0 0
      %643 = vmatpush1.bf16.msra.mxu0 0
      %644 = vmatprep.subr.bf16.mxu0 0
      %645 = vmatpush1.bf16.msra.mxu0 0
      %646 = vmatprep.subr.bf16.mxu0 0
      %647 = vmatpush1.bf16.msra.mxu0 0
      %648 = vmatprep.subr.bf16.mxu0 0
      %649 = vmatpush1.bf16.msra.mxu0 0
      %650 = vmatprep.subr.bf16.mxu0 0
      %651 = vmatpush1.bf16.msra.mxu0 0
      %652 = vmatprep.subr.bf16.mxu0 0
      %653 = vmatpush1.bf16.msra.mxu0 0
      %654 = vmatprep.subr.bf16.mxu0 0
      %655 = vmatpush1.bf16.msra.mxu0 0
      %656 = vmatprep.subr.bf16.mxu0 0
      %657 = vmatpush1.bf16.msra.mxu0 0
      %658 = vmatprep.subr.bf16.mxu0 0
      %659 = vmatpush1.bf16.msra.mxu0 0
      %660 = vmatprep.subr.bf16.mxu0 0
      %661 = vmatpush1.bf16.msra.mxu0 0
      %662 = vmatprep.mubr.bf16.mxu0 0
      %663 = vmatmul.mubr.bf16.gmra.mrb[0].mxu0 %v628
      %v664 = vpop.f32.mrb[0].mxu0
      %v665 = vadd.f32 %v613, %v664
      %v666 = vpop.f32.mrb[0].mxu0
      %v667 = vpop.f32.mrb[0].mxu0
      %v668 = vadd.f32 %v613, %v667
      %v669 = vpop.f32.mrb[0].mxu0
      %670 = vdwg.mxu0
      %v671 = vmax.f32 %v665, 0.0
      %v672 = vmax.f32 %v668, 0.0
      %v673 = vpack.c.bf16 %v672, %v671
      %v675 = vlaneseq
      %v676 = vshrl.u32 %v675, 7
      %v677 = vsub.s32 0, %v676
      %v678 = vrot.slane %v574, %v677
      %v696 = vunpack.c.l.b16 %v558
      %v697 = vunpack.c.l.b16 %v559
      %v698 = vunpack.c.l.b16 %v560
      %v699 = vunpack.c.l.b16 %v561
      %v700 = vunpack.c.l.b16 %v562
      %v701 = vunpack.c.l.b16 %v563
      %v702 = vunpack.c.l.b16 %v564
      %v703 = vunpack.c.l.b16 %v565
      %v704 = vunpack.c.l.b16 %v566
      %v705 = vunpack.c.l.b16 %v567
      %v706 = vunpack.c.l.b16 %v568
      %v707 = vunpack.c.l.b16 %v569
      %v708 = vunpack.c.l.b16 %v570
      %v709 = vunpack.c.l.b16 %v571
      %v710 = vunpack.c.l.b16 %v572
      %v711 = vunpack.c.l.b16 %v573
      %v712 = vpack.c.b16 %v697, %v696
      %v713 = vpack.c.b16 %v699, %v698
      %v714 = vpack.c.b16 %v701, %v700
      %v715 = vpack.c.b16 %v703, %v702
      %v716 = vpack.c.b16 %v705, %v704
      %v717 = vpack.c.b16 %v707, %v706
      %v718 = vpack.c.b16 %v709, %v708
      %v719 = vpack.c.b16 %v711, %v710
      %728 = vmatprep.subr.bf16.mxu0 0
      %729 = vmatpush1.bf16.msra.mxu0 %v712
      %730 = vmatprep.subr.bf16.mxu0 0
      %731 = vmatpush1.bf16.msra.mxu0 %v713
      %732 = vmatprep.subr.bf16.mxu0 0
      %733 = vmatpush1.bf16.msra.mxu0 %v714
      %734 = vmatprep.subr.bf16.mxu0 0
      %735 = vmatpush1.bf16.msra.mxu0 %v715
      %736 = vmatprep.subr.bf16.mxu0 0
      %737 = vmatpush1.bf16.msra.mxu0 %v716
      %738 = vmatprep.subr.bf16.mxu0 0
      %739 = vmatpush1.bf16.msra.mxu0 %v717
      %740 = vmatprep.subr.bf16.mxu0 0
      %741 = vmatpush1.bf16.msra.mxu0 %v718
      %742 = vmatprep.subr.bf16.mxu0 0
      %743 = vmatpush1.bf16.msra.mxu0 %v719
      %744 = vmatprep.subr.bf16.mxu0 0
      %745 = vmatpush1.bf16.msra.mxu0 0
      %746 = vmatprep.subr.bf16.mxu0 0
      %747 = vmatpush1.bf16.msra.mxu0 0
      %748 = vmatprep.subr.bf16.mxu0 0
      %749 = vmatpush1.bf16.msra.mxu0 0
      %750 = vmatprep.subr.bf16.mxu0 0
      %751 = vmatpush1.bf16.msra.mxu0 0
      %752 = vmatprep.subr.bf16.mxu0 0
      %753 = vmatpush1.bf16.msra.mxu0 0
      %754 = vmatprep.subr.bf16.mxu0 0
      %755 = vmatpush1.bf16.msra.mxu0 0
      %756 = vmatprep.subr.bf16.mxu0 0
      %757 = vmatpush1.bf16.msra.mxu0 0
      %758 = vmatprep.subr.bf16.mxu0 0
      %759 = vmatpush1.bf16.msra.mxu0 0
      %760 = vmatprep.mubr.bf16.mxu0 0
      %761 = vmatmul.mubr.bf16.gmra.mrb[0].mxu0 %v673
      %v762 = vpop.f32.mrb[0].mxu0
      %v763 = vadd.f32 %v678, %v762
      %v764 = vpop.f32.mrb[0].mxu0
      %v765 = vpop.f32.mrb[0].mxu0
      %v766 = vadd.f32 %v678, %v765
      %v767 = vpop.f32.mrb[0].mxu0
      %768 = vdwg.mxu0
      %v769 = vmax.f32 %v763, 0.0
      %v770 = vmax.f32 %v766, 0.0
      %v771 = vpack.c.bf16 %v770, %v769
      %v773 = vlaneseq
      %v774 = vshrl.u32 %v773, 7
      %v775 = vsub.s32 0, %v774
      %v776 = vrot.slane %v591, %v775
      %v794 = vunpack.c.l.b16 %v575
      %v795 = vunpack.c.l.b16 %v576
      %v796 = vunpack.c.l.b16 %v577
      %v797 = vunpack.c.l.b16 %v578
      %v798 = vunpack.c.l.b16 %v579
      %v799 = vunpack.c.l.b16 %v580
      %v800 = vunpack.c.l.b16 %v581
      %v801 = vunpack.c.l.b16 %v582
      %v802 = vunpack.c.l.b16 %v583
      %v803 = vunpack.c.l.b16 %v584
      %v804 = vunpack.c.l.b16 %v585
      %v805 = vunpack.c.l.b16 %v586
      %v806 = vunpack.c.l.b16 %v587
      %v807 = vunpack.c.l.b16 %v588
      %v808 = vunpack.c.l.b16 %v589
      %v809 = vunpack.c.l.b16 %v590
      %v810 = vpack.c.b16 %v795, %v794
      %v811 = vpack.c.b16 %v797, %v796
      %v812 = vpack.c.b16 %v799, %v798
      %v813 = vpack.c.b16 %v801, %v800
      %v814 = vpack.c.b16 %v803, %v802
      %v815 = vpack.c.b16 %v805, %v804
      %v816 = vpack.c.b16 %v807, %v806
      %v817 = vpack.c.b16 %v809, %v808
      %826 = vmatprep.subr.bf16.mxu0 0
      %827 = vmatpush1.bf16.msra.mxu0 %v810
      %828 = vmatprep.subr.bf16.mxu0 0
      %829 = vmatpush1.bf16.msra.mxu0 %v811
      %830 = vmatprep.subr.bf16.mxu0 0
      %831 = vmatpush1.bf16.msra.mxu0 %v812
      %832 = vmatprep.subr.bf16.mxu0 0
      %833 = vmatpush1.bf16.msra.mxu0 %v813
      %834 = vmatprep.subr.bf16.mxu0 0
      %835 = vmatpush1.bf16.msra.mxu0 %v814
      %836 = vmatprep.subr.bf16.mxu0 0
      %837 = vmatpush1.bf16.msra.mxu0 %v815
      %838 = vmatprep.subr.bf16.mxu0 0
      %839 = vmatpush1.bf16.msra.mxu0 %v816
      %840 = vmatprep.subr.bf16.mxu0 0
      %841 = vmatpush1.bf16.msra.mxu0 %v817
      %842 = vmatprep.subr.bf16.mxu0 0
      %843 = vmatpush1.bf16.msra.mxu0 0
      %844 = vmatprep.subr.bf16.mxu0 0
      %845 = vmatpush1.bf16.msra.mxu0 0
      %846 = vmatprep.subr.bf16.mxu0 0
      %847 = vmatpush1.bf16.msra.mxu0 0
      %848 = vmatprep.subr.bf16.mxu0 0
      %849 = vmatpush1.bf16.msra.mxu0 0
      %850 = vmatprep.subr.bf16.mxu0 0
      %851 = vmatpush1.bf16.msra.mxu0 0
      %852 = vmatprep.subr.bf16.mxu0 0
      %853 = vmatpush1.bf16.msra.mxu0 0
      %854 = vmatprep.subr.bf16.mxu0 0
      %855 = vmatpush1.bf16.msra.mxu0 0
      %856 = vmatprep.subr.bf16.mxu0 0
      %857 = vmatpush1.bf16.msra.mxu0 0
      %858 = vmatprep.mubr.bf16.mxu0 0
      %859 = vmatmul.mubr.bf16.gmra.mrb[0].mxu0 %v771
      %v860 = vpop.f32.mrb[0].mxu0
      %v861 = vadd.f32 %v776, %v860
      %v862 = vpop.f32.mrb[0].mxu0
      %v863 = vpop.f32.mrb[0].mxu0
      %v864 = vadd.f32 %v776, %v863
      %v865 = vpop.f32.mrb[0].mxu0
      %866 = vdwg.mxu0
      %v867 = vmax.f32 %v861, 0.0
      %v868 = vmax.f32 %v864, 0.0
      %v869 = vpack.c.bf16 %v868, %v867
      %v871 = vlaneseq
      %v872 = vshrl.u32 %v871, 7
      %v873 = vsub.s32 0, %v872
      %v874 = vrot.slane %v608, %v873
      %v892 = vunpack.c.l.b16 %v592
      %v893 = vunpack.c.l.b16 %v593
      %v894 = vunpack.c.l.b16 %v594
      %v895 = vunpack.c.l.b16 %v595
      %v896 = vunpack.c.l.b16 %v596
      %v897 = vunpack.c.l.b16 %v597
      %v898 = vunpack.c.l.b16 %v598
      %v899 = vunpack.c.l.b16 %v599
      %v900 = vunpack.c.l.b16 %v600
      %v901 = vunpack.c.l.b16 %v601
      %v902 = vunpack.c.l.b16 %v602
      %v903 = vunpack.c.l.b16 %v603
      %v904 = vunpack.c.l.b16 %v604
      %v905 = vunpack.c.l.b16 %v605
      %v906 = vunpack.c.l.b16 %v606
      %v907 = vunpack.c.l.b16 %v607
      %v908 = vpack.c.b16 %v893, %v892
      %v909 = vpack.c.b16 %v895, %v894
      %v910 = vpack.c.b16 %v897, %v896
      %v911 = vpack.c.b16 %v899, %v898
      %v912 = vpack.c.b16 %v901, %v900
      %v913 = vpack.c.b16 %v903, %v902
      %v914 = vpack.c.b16 %v905, %v904
      %v915 = vpack.c.b16 %v907, %v906
      %924 = vmatprep.subr.bf16.mxu0 0
      %925 = vmatpush1.bf16.msra.mxu0 %v908
      %926 = vmatprep.subr.bf16.mxu0 0
      %927 = vmatpush1.bf16.msra.mxu0 %v909
      %928 = vmatprep.subr.bf16.mxu0 0
      %929 = vmatpush1.bf16.msra.mxu0 %v910
      %930 = vmatprep.subr.bf16.mxu0 0
      %931 = vmatpush1.bf16.msra.mxu0 %v911
      %932 = vmatprep.subr.bf16.mxu0 0
      %933 = vmatpush1.bf16.msra.mxu0 %v912
      %934 = vmatprep.subr.bf16.mxu0 0
      %935 = vmatpush1.bf16.msra.mxu0 %v913
      %936 = vmatprep.subr.bf16.mxu0 0
      %937 = vmatpush1.bf16.msra.mxu0 %v914
      %938 = vmatprep.subr.bf16.mxu0 0
      %939 = vmatpush1.bf16.msra.mxu0 %v915
      %940 = vmatprep.subr.bf16.mxu0 0
      %941 = vmatpush1.bf16.msra.mxu0 0
      %942 = vmatprep.subr.bf16.mxu0 0
      %943 = vmatpush1.bf16.msra.mxu0 0
      %944 = vmatprep.subr.bf16.mxu0 0
      %945 = vmatpush1.bf16.msra.mxu0 0
      %946 = vmatprep.subr.bf16.mxu0 0
      %947 = vmatpush1.bf16.msra.mxu0 0
      %948 = vmatprep.subr.bf16.mxu0 0
      %949 = vmatpush1.bf16.msra.mxu0 0
      %950 = vmatprep.subr.bf16.mxu0 0
      %951 = vmatpush1.bf16.msra.mxu0 0
      %952 = vmatprep.subr.bf16.mxu0 0
      %953 = vmatpush1.bf16.msra.mxu0 0
      %954 = vmatprep.subr.bf16.mxu0 0
      %955 = vmatpush1.bf16.msra.mxu0 0
      %956 = vmatprep.mubr.bf16.mxu0 0
      %957 = vmatmul.mubr.bf16.gmra.mrb[0].mxu0 %v869
      %v958 = vpop.f32.mrb[0].mxu0
      %v959 = vadd.f32 %v874, %v958
      %v960 = vpop.f32.mrb[0].mxu0
      %v961 = vpop.f32.mrb[0].mxu0
      %v962 = vadd.f32 %v874, %v961
      %v963 = vpop.f32.mrb[0].mxu0
      %964 = vdwg.mxu0
      %v965 = vld [vmem:[%s9] sm:$0xf]
      %v966 = vld [vmem:[%s9 + $0x4] sm:$0xf]
      %v967 = vld [vmem:[%s10] sm:$0x1]
      %v968 = vld [vmem:[%s11] sm:$0xf]
      %v969 = vld [vmem:[%s11 + $0x4] sm:$0xf]
      %v970 = vld [vmem:[%s11 + $0x8] sm:$0xf]
      %v971 = vld [vmem:[%s11 + $0xc] sm:$0xf]
      %v972 = vld [vmem:[%s11 + $0x10] sm:$0xf]
      %v973 = vld [vmem:[%s11 + $0x14] sm:$0xf]
      %v974 = vld [vmem:[%s11 + $0x18] sm:$0xf]
      %v975 = vld [vmem:[%s11 + $0x1c] sm:$0xf]
      %v976 = vld [vmem:[%s11 + $0x20] sm:$0xf]
      %v977 = vld [vmem:[%s11 + $0x24] sm:$0xf]
      %v978 = vld [vmem:[%s11 + $0x28] sm:$0xf]
      %v979 = vld [vmem:[%s11 + $0x2c] sm:$0xf]
      %v980 = vld [vmem:[%s11 + $0x30] sm:$0xf]
      %v981 = vld [vmem:[%s11 + $0x34] sm:$0xf]
      %v982 = vld [vmem:[%s11 + $0x38] sm:$0xf]
      %v983 = vld [vmem:[%s11 + $0x3c] sm:$0xf]
      %v984 = vld [vmem:[%s12] sm:$0x1]
      %v985 = vld [vmem:[%s13] sm:$0xf]
      %v986 = vld [vmem:[%s13 + $0x4] sm:$0xf]
      %v987 = vld [vmem:[%s13 + $0x8] sm:$0xf]
      %v988 = vld [vmem:[%s13 + $0xc] sm:$0xf]
      %v989 = vld [vmem:[%s13 + $0x10] sm:$0xf]
      %v990 = vld [vmem:[%s13 + $0x14] sm:$0xf]
      %v991 = vld [vmem:[%s13 + $0x18] sm:$0xf]
      %v992 = vld [vmem:[%s13 + $0x1c] sm:$0xf]
      %v993 = vld [vmem:[%s13 + $0x20] sm:$0xf]
      %v994 = vld [vmem:[%s13 + $0x24] sm:$0xf]
      %v995 = vld [vmem:[%s13 + $0x28] sm:$0xf]
      %v996 = vld [vmem:[%s13 + $0x2c] sm:$0xf]
      %v997 = vld [vmem:[%s13 + $0x30] sm:$0xf]
      %v998 = vld [vmem:[%s13 + $0x34] sm:$0xf]
      %v999 = vld [vmem:[%s13 + $0x38] sm:$0xf]
      %v1000 = vld [vmem:[%s13 + $0x3c] sm:$0xf]
      %v1001 = vld [vmem:[%s14] sm:$0x1]
      %v1002 = vld [vmem:[%s15] sm:$0xf]
      %v1003 = vld [vmem:[%s15 + $0x4] sm:$0xf]
      %v1004 = vld [vmem:[%s15 + $0x8] sm:$0xf]
      %v1005 = vld [vmem:[%s15 + $0xc] sm:$0xf]
      %v1006 = vld [vmem:[%s15 + $0x10] sm:$0xf]
      %v1007 = vld [vmem:[%s15 + $0x14] sm:$0xf]
      %v1008 = vld [vmem:[%s15 + $0x18] sm:$0xf]
      %v1009 = vld [vmem:[%s15 + $0x1c] sm:$0xf]
      %v1010 = vld [vmem:[%s15 + $0x20] sm:$0xf]
      %v1011 = vld [vmem:[%s15 + $0x24] sm:$0xf]
      %v1012 = vld [vmem:[%s15 + $0x28] sm:$0xf]
      %v1013 = vld [vmem:[%s15 + $0x2c] sm:$0xf]
      %v1014 = vld [vmem:[%s15 + $0x30] sm:$0xf]
      %v1015 = vld [vmem:[%s15 + $0x34] sm:$0xf]
      %v1016 = vld [vmem:[%s15 + $0x38] sm:$0xf]
      %v1017 = vld [vmem:[%s15 + $0x3c] sm:$0xf]
      %v1018 = vld [vmem:[%s16] sm:$0x1]
      %v1020 = vlaneseq
      %v1021 = vshrl.u32 %v1020, 7
      %v1022 = vsub.s32 0, %v1021
      %v1023 = vrot.slane %v967, %v1022
      %v1027 = vunpack.c.l.b16 %v965
      %v1028 = vunpack.c.l.b16 %v966
      %v1029 = vpack.c.b16 %v1028, %v1027
      %1031 = vmatprep.subr.bf16.mxu0 0
      %1032 = vmatpush1.bf16.msra.mxu0 %v1029
      %1033 = vmatprep.subr.bf16.mxu0 0
      %1034 = vmatpush1.bf16.msra.mxu0 0
      %1035 = vmatprep.subr.bf16.mxu0 0
      %1036 = vmatpush1.bf16.msra.mxu0 0
      %1037 = vmatprep.subr.bf16.mxu0 0
      %1038 = vmatpush1.bf16.msra.mxu0 0
      %1039 = vmatprep.subr.bf16.mxu0 0
      %1040 = vmatpush1.bf16.msra.mxu0 0
      %1041 = vmatprep.subr.bf16.mxu0 0
      %1042 = vmatpush1.bf16.msra.mxu0 0
      %1043 = vmatprep.subr.bf16.mxu0 0
      %1044 = vmatpush1.bf16.msra.mxu0 0
      %1045 = vmatprep.subr.bf16.mxu0 0
      %1046 = vmatpush1.bf16.msra.mxu0 0
      %1047 = vmatprep.subr.bf16.mxu0 0
      %1048 = vmatpush1.bf16.msra.mxu0 0
      %1049 = vmatprep.subr.bf16.mxu0 0
      %1050 = vmatpush1.bf16.msra.mxu0 0
      %1051 = vmatprep.subr.bf16.mxu0 0
      %1052 = vmatpush1.bf16.msra.mxu0 0
      %1053 = vmatprep.subr.bf16.mxu0 0
      %1054 = vmatpush1.bf16.msra.mxu0 0
      %1055 = vmatprep.subr.bf16.mxu0 0
      %1056 = vmatpush1.bf16.msra.mxu0 0
      %1057 = vmatprep.subr.bf16.mxu0 0
      %1058 = vmatpush1.bf16.msra.mxu0 0
      %1059 = vmatprep.subr.bf16.mxu0 0
      %1060 = vmatpush1.bf16.msra.mxu0 0
      %1061 = vmatprep.subr.bf16.mxu0 0
      %1062 = vmatpush1.bf16.msra.mxu0 0
      %1063 = vmatprep.mubr.bf16.mxu0 0
      %1064 = vmatmul.mubr.bf16.gmra.mrb[0].mxu0 %v628
      %v1065 = vpop.f32.mrb[0].mxu0
      %v1066 = vadd.f32 %v1023, %v1065
      %v1067 = vpop.f32.mrb[0].mxu0
      %v1068 = vpop.f32.mrb[0].mxu0
      %v1069 = vadd.f32 %v1023, %v1068
      %v1070 = vpop.f32.mrb[0].mxu0
      %1071 = vdwg.mxu0
      %v1072 = vmax.f32 %v1066, 0.0
      %v1073 = vmax.f32 %v1069, 0.0
      %v1074 = vpack.c.bf16 %v1073, %v1072
      %v1076 = vlaneseq
      %v1077 = vshrl.u32 %v1076, 7
      %v1078 = vsub.s32 0, %v1077
      %v1079 = vrot.slane %v984, %v1078
      %v1097 = vunpack.c.l.b16 %v968
      %v1098 = vunpack.c.l.b16 %v969
      %v1099 = vunpack.c.l.b16 %v970
      %v1100 = vunpack.c.l.b16 %v971
      %v1101 = vunpack.c.l.b16 %v972
      %v1102 = vunpack.c.l.b16 %v973
      %v1103 = vunpack.c.l.b16 %v974
      %v1104 = vunpack.c.l.b16 %v975
      %v1105 = vunpack.c.l.b16 %v976
      %v1106 = vunpack.c.l.b16 %v977
      %v1107 = vunpack.c.l.b16 %v978
      %v1108 = vunpack.c.l.b16 %v979
      %v1109 = vunpack.c.l.b16 %v980
      %v1110 = vunpack.c.l.b16 %v981
      %v1111 = vunpack.c.l.b16 %v982
      %v1112 = vunpack.c.l.b16 %v983
      %v1113 = vpack.c.b16 %v1098, %v1097
      %v1114 = vpack.c.b16 %v1100, %v1099
      %v1115 = vpack.c.b16 %v1102, %v1101
      %v1116 = vpack.c.b16 %v1104, %v1103
      %v1117 = vpack.c.b16 %v1106, %v1105
      %v1118 = vpack.c.b16 %v1108, %v1107
      %v1119 = vpack.c.b16 %v1110, %v1109
      %v1120 = vpack.c.b16 %v1112, %v1111
      %1129 = vmatprep.subr.bf16.mxu0 0
      %1130 = vmatpush1.bf16.msra.mxu0 %v1113
      %1131 = vmatprep.subr.bf16.mxu0 0
      %1132 = vmatpush1.bf16.msra.mxu0 %v1114
      %1133 = vmatprep.subr.bf16.mxu0 0
      %1134 = vmatpush1.bf16.msra.mxu0 %v1115
      %1135 = vmatprep.subr.bf16.mxu0 0
      %1136 = vmatpush1.bf16.msra.mxu0 %v1116
      %1137 = vmatprep.subr.bf16.mxu0 0
      %1138 = vmatpush1.bf16.msra.mxu0 %v1117
      %1139 = vmatprep.subr.bf16.mxu0 0
      %1140 = vmatpush1.bf16.msra.mxu0 %v1118
      %1141 = vmatprep.subr.bf16.mxu0 0
      %1142 = vmatpush1.bf16.msra.mxu0 %v1119
      %1143 = vmatprep.subr.bf16.mxu0 0
      %1144 = vmatpush1.bf16.msra.mxu0 %v1120
      %1145 = vmatprep.subr.bf16.mxu0 0
      %1146 = vmatpush1.bf16.msra.mxu0 0
      %1147 = vmatprep.subr.bf16.mxu0 0
      %1148 = vmatpush1.bf16.msra.mxu0 0
      %1149 = vmatprep.subr.bf16.mxu0 0
      %1150 = vmatpush1.bf16.msra.mxu0 0
      %1151 = vmatprep.subr.bf16.mxu0 0
      %1152 = vmatpush1.bf16.msra.mxu0 0
      %1153 = vmatprep.subr.bf16.mxu0 0
      %1154 = vmatpush1.bf16.msra.mxu0 0
      %1155 = vmatprep.subr.bf16.mxu0 0
      %1156 = vmatpush1.bf16.msra.mxu0 0
      %1157 = vmatprep.subr.bf16.mxu0 0
      %1158 = vmatpush1.bf16.msra.mxu0 0
      %1159 = vmatprep.subr.bf16.mxu0 0
      %1160 = vmatpush1.bf16.msra.mxu0 0
      %1161 = vmatprep.mubr.bf16.mxu0 0
      %1162 = vmatmul.mubr.bf16.gmra.mrb[0].mxu0 %v1074
      %v1163 = vpop.f32.mrb[0].mxu0
      %v1164 = vadd.f32 %v1079, %v1163
      %v1165 = vpop.f32.mrb[0].mxu0
      %v1166 = vpop.f32.mrb[0].mxu0
      %v1167 = vadd.f32 %v1079, %v1166
      %v1168 = vpop.f32.mrb[0].mxu0
      %1169 = vdwg.mxu0
      %v1170 = vmax.f32 %v1164, 0.0
      %v1171 = vmax.f32 %v1167, 0.0
      %v1172 = vpack.c.bf16 %v1171, %v1170
      %v1174 = vlaneseq
      %v1175 = vshrl.u32 %v1174, 7
      %v1176 = vsub.s32 0, %v1175
      %v1177 = vrot.slane %v1001, %v1176
      %v1195 = vunpack.c.l.b16 %v985
      %v1196 = vunpack.c.l.b16 %v986
      %v1197 = vunpack.c.l.b16 %v987
      %v1198 = vunpack.c.l.b16 %v988
      %v1199 = vunpack.c.l.b16 %v989
      %v1200 = vunpack.c.l.b16 %v990
      %v1201 = vunpack.c.l.b16 %v991
      %v1202 = vunpack.c.l.b16 %v992
      %v1203 = vunpack.c.l.b16 %v993
      %v1204 = vunpack.c.l.b16 %v994
      %v1205 = vunpack.c.l.b16 %v995
      %v1206 = vunpack.c.l.b16 %v996
      %v1207 = vunpack.c.l.b16 %v997
      %v1208 = vunpack.c.l.b16 %v998
      %v1209 = vunpack.c.l.b16 %v999
      %v1210 = vunpack.c.l.b16 %v1000
      %v1211 = vpack.c.b16 %v1196, %v1195
      %v1212 = vpack.c.b16 %v1198, %v1197
      %v1213 = vpack.c.b16 %v1200, %v1199
      %v1214 = vpack.c.b16 %v1202, %v1201
      %v1215 = vpack.c.b16 %v1204, %v1203
      %v1216 = vpack.c.b16 %v1206, %v1205
      %v1217 = vpack.c.b16 %v1208, %v1207
      %v1218 = vpack.c.b16 %v1210, %v1209
      %1227 = vmatprep.subr.bf16.mxu0 0
      %1228 = vmatpush1.bf16.msra.mxu0 %v1211
      %1229 = vmatprep.subr.bf16.mxu0 0
      %1230 = vmatpush1.bf16.msra.mxu0 %v1212
      %1231 = vmatprep.subr.bf16.mxu0 0
      %1232 = vmatpush1.bf16.msra.mxu0 %v1213
      %1233 = vmatprep.subr.bf16.mxu0 0
      %1234 = vmatpush1.bf16.msra.mxu0 %v1214
      %1235 = vmatprep.subr.bf16.mxu0 0
      %1236 = vmatpush1.bf16.msra.mxu0 %v1215
      %1237 = vmatprep.subr.bf16.mxu0 0
      %1238 = vmatpush1.bf16.msra.mxu0 %v1216
      %1239 = vmatprep.subr.bf16.mxu0 0
      %1240 = vmatpush1.bf16.msra.mxu0 %v1217
      %1241 = vmatprep.subr.bf16.mxu0 0
      %1242 = vmatpush1.bf16.msra.mxu0 %v1218
      %1243 = vmatprep.subr.bf16.mxu0 0
      %1244 = vmatpush1.bf16.msra.mxu0 0
      %1245 = vmatprep.subr.bf16.mxu0 0
      %1246 = vmatpush1.bf16.msra.mxu0 0
      %1247 = vmatprep.subr.bf16.mxu0 0
      %1248 = vmatpush1.bf16.msra.mxu0 0
      %1249 = vmatprep.subr.bf16.mxu0 0
      %1250 = vmatpush1.bf16.msra.mxu0 0
      %1251 = vmatprep.subr.bf16.mxu0 0
      %1252 = vmatpush1.bf16.msra.mxu0 0
      %1253 = vmatprep.subr.bf16.mxu0 0
      %1254 = vmatpush1.bf16.msra.mxu0 0
      %1255 = vmatprep.subr.bf16.mxu0 0
      %1256 = vmatpush1.bf16.msra.mxu0 0
      %1257 = vmatprep.subr.bf16.mxu0 0
      %1258 = vmatpush1.bf16.msra.mxu0 0
      %1259 = vmatprep.mubr.bf16.mxu0 0
      %1260 = vmatmul.mubr.bf16.gmra.mrb[0].mxu0 %v1172
      %v1261 = vpop.f32.mrb[0].mxu0
      %v1262 = vadd.f32 %v1177, %v1261
      %v1263 = vpop.f32.mrb[0].mxu0
      %v1264 = vpop.f32.mrb[0].mxu0
      %v1265 = vadd.f32 %v1177, %v1264
      %v1266 = vpop.f32.mrb[0].mxu0
      %1267 = vdwg.mxu0
      %v1268 = vmax.f32 %v1262, 0.0
      %v1269 = vmax.f32 %v1265, 0.0
      %v1270 = vpack.c.bf16 %v1269, %v1268
      %v1287 = vunpack.c.l.b16 %v1002
      %v1288 = vunpack.c.l.b16 %v1003
      %v1289 = vunpack.c.l.b16 %v1004
      %v1290 = vunpack.c.l.b16 %v1005
      %v1291 = vunpack.c.l.b16 %v1006
      %v1292 = vunpack.c.l.b16 %v1007
      %v1293 = vunpack.c.l.b16 %v1008
      %v1294 = vunpack.c.l.b16 %v1009
      %v1295 = vunpack.c.l.b16 %v1010
      %v1296 = vunpack.c.l.b16 %v1011
      %v1297 = vunpack.c.l.b16 %v1012
      %v1298 = vunpack.c.l.b16 %v1013
      %v1299 = vunpack.c.l.b16 %v1014
      %v1300 = vunpack.c.l.b16 %v1015
      %v1301 = vunpack.c.l.b16 %v1016
      %v1302 = vunpack.c.l.b16 %v1017
      %v1303 = vpack.c.b16 %v1288, %v1287
      %v1304 = vpack.c.b16 %v1290, %v1289
      %v1305 = vpack.c.b16 %v1292, %v1291
      %v1306 = vpack.c.b16 %v1294, %v1293
      %v1307 = vpack.c.b16 %v1296, %v1295
      %v1308 = vpack.c.b16 %v1298, %v1297
      %v1309 = vpack.c.b16 %v1300, %v1299
      %v1310 = vpack.c.b16 %v1302, %v1301
      %1319 = vmatprep.subr.bf16.mxu0 0
      %1320 = vmatpush1.bf16.msra.mxu0 %v1303
      %1321 = vmatprep.subr.bf16.mxu0 0
      %1322 = vmatpush1.bf16.msra.mxu0 %v1304
      %1323 = vmatprep.subr.bf16.mxu0 0
      %1324 = vmatpush1.bf16.msra.mxu0 %v1305
      %1325 = vmatprep.subr.bf16.mxu0 0
      %1326 = vmatpush1.bf16.msra.mxu0 %v1306
      %1327 = vmatprep.subr.bf16.mxu0 0
      %1328 = vmatpush1.bf16.msra.mxu0 %v1307
      %1329 = vmatprep.subr.bf16.mxu0 0
      %1330 = vmatpush1.bf16.msra.mxu0 %v1308
      %1331 = vmatprep.subr.bf16.mxu0 0
      %1332 = vmatpush1.bf16.msra.mxu0 %v1309
      %1333 = vmatprep.subr.bf16.mxu0 0
      %1334 = vmatpush1.bf16.msra.mxu0 %v1310
      %1335 = vmatprep.subr.bf16.mxu0 0
      %1336 = vmatpush1.bf16.msra.mxu0 0
      %1337 = vmatprep.subr.bf16.mxu0 0
      %1338 = vmatpush1.bf16.msra.mxu0 0
      %1339 = vmatprep.subr.bf16.mxu0 0
      %1340 = vmatpush1.bf16.msra.mxu0 0
      %1341 = vmatprep.subr.bf16.mxu0 0
      %1342 = vmatpush1.bf16.msra.mxu0 0
      %1343 = vmatprep.subr.bf16.mxu0 0
      %1344 = vmatpush1.bf16.msra.mxu0 0
      %1345 = vmatprep.subr.bf16.mxu0 0
      %1346 = vmatpush1.bf16.msra.mxu0 0
      %1347 = vmatprep.subr.bf16.mxu0 0
      %1348 = vmatpush1.bf16.msra.mxu0 0
      %1349 = vmatprep.subr.bf16.mxu0 0
      %1350 = vmatpush1.bf16.msra.mxu0 0
      %1351 = vmatprep.mubr.bf16.mxu0 0
      %1352 = vmatmul.mubr.bf16.gmra.mrb[0].mxu0 %v1270
      %v1353 = vpop.f32.mrb[0].mxu0
      %v1354 = vadd.f32 0.0, %v1353
      %v1355 = vpop.f32.mrb[0].mxu0
      %v1356 = vpop.f32.mrb[0].mxu0
      %v1357 = vadd.f32 0.0, %v1356
      %v1358 = vpop.f32.mrb[0].mxu0
      %1359 = vdwg.mxu0
      %v1360 = vadd.f32 %v959, %v1354
      %v1361 = vadd.f32 %v962, %v1357
      %v1363 = vlaneseq
      %v1364 = vshrl.u32 %v1363, 7
      %v1365 = vsub.s32 0, %v1364
      %v1366 = vrot.slane %v1018, %v1365
      %v1368 = vadd.f32 %v1360, %v1366
      %v1369 = vadd.f32 %v1361, %v1366
      %1370 = vst [vmem:[%s550] sm:$0xff] %v1368
      %1371 = vst [vmem:[%s550 + $0x8] sm:$0xff] %v1369
      %s1372 = smul.u32 2, %s28
      %p1373 = scmp.lt.s32.totalorder %s1372, 3
      %s1374 = scalar_select %p1373, %s1372, 3
      %s1375 = smul.addr %s1374, 8
      %s1376 = scalar_lea.vmem %s17, %s1375
      // Predicated region
      $region89: #{fused_mlp_forward.1} parent=87 // pred_check
        %p1377 = pneg %p408
      $region90: #{fused_mlp_forward.1} parent=87 // pred_check_branch
        %1379 = sbr.rel (%p1377) target = $region92
      $region91: #{fused_mlp_forward.1} parent=87 // pred_region
        %s1380 = smul.u32 2, %s28
      $region92: #{fused_mlp_forward.1} parent=87 // pred_fallthru
        _
    $region88: #{fused_mlp_forward.1} parent=5 // pred_fallthru
      _
    %p1381 = scmp.le.s32.totalorder 2, %s23
    // Predicated region
    $region93: #{fused_mlp_forward.1} parent=5 // pred_check
      %p1382 = pneg %p1381
    $region94: #{fused_mlp_forward.1} parent=5 // pred_check_branch
      %1384 = sbr.rel (%p1382) target = $region96
    $region95: #{fused_mlp_forward.1} parent=5 // pred_region
      %s1385 = ssub.s32 %s23, 2
      // Predicated region
      $region97: #{fused_mlp_forward.1} parent=95 // pred_check
        %p1386 = pneg %p414
      $region98: #{fused_mlp_forward.1} parent=95 // pred_check_branch
        %1388 = sbr.rel (%p1386) target = $region100
      $region99: #{fused_mlp_forward.1} parent=95 // pred_region
        %s1389 = smul.u32 2, %s29
        %p1390 = scmp.lt.s32.totalorder %s1389, 3
        %s1391 = scalar_select %p1390, %s1389, 3
        %s1392 = smul.addr %s1391, 8
        %s1393 = scalar_lea.vmem %s17, %s1392
      $region100: #{fused_mlp_forward.1} parent=95 // pred_fallthru
        _
    $region96: #{fused_mlp_forward.1} parent=5 // pred_fallthru
      _
  $region6: #{fused_mlp_forward.1} parent=0 // loop_footer
    %s27 = sadd.s32 1, %s23
  $region7: #{fused_mlp_forward.1} parent=0 // loop_footer_branch
    %22 = sbr.rel target = $region3
  $region8: #{fused_mlp_forward.1} parent=0 // loop_exit
    _

</llo_original>
